<compile_context>
chip_gen: v6e
topology: v6e:2x2x1
jax: 0.10.0
libtpu: 0.0.40
codegen_flags: <defaults>
</compile_context>

<pallas_src>
import math
import functools

import jax
import jax.numpy as jnp
from jax import lax
from jax.experimental import pallas as pl
from jax.experimental.pallas import tpu as pltpu


# ----------------------------- small helpers ---------------------------------

def _round_up(x, m):
    return ((x + m - 1) // m) * m


def _choose_tile(v):
    for c in (1024, 512, 256, 128):
        if v % c == 0:
            return c
    return v


# ----------------------------- in-kernel helpers -----------------------------

def _layer_norm_masked(x, w, b, d_real, eps=1e-5):
    """LayerNorm over the first `d_real` columns of a zero-padded (N, D_pad) tensor.

    Padded columns of x are zero on entry; w/b are zero-padded, so padded output
    columns stay exactly zero.  Matches PyTorch nn.LayerNorm (biased variance, eps=1e-5).
    """
    dp = x.shape[-1]
    mask = (lax.broadcasted_iota(jnp.int32, (1, dp), 1) < d_real).astype(x.dtype)
    inv_d = 1.0 / float(d_real)
    mean = jnp.sum(x, axis=-1, keepdims=True) * inv_d          # padded cols contribute 0
    diff = (x - mean) * mask
    var = jnp.sum(diff * diff, axis=-1, keepdims=True) * inv_d
    return diff * lax.rsqrt(var + eps) * w + b


def _gelu_exact(x):
    # PyTorch nn.GELU() default = exact erf formulation
    return 0.5 * x * (1.0 + lax.erf(x * (1.0 / math.sqrt(2.0))))


def _linear(x_f32, w_bf16, b_f32):
    # bf16 MXU matmul with f32 accumulation; bias add in f32.
    return jnp.dot(x_f32.astype(jnp.bfloat16), w_bf16,
                   preferred_element_type=jnp.float32) + b_f32


# ----------------------------- Pallas kernels --------------------------------

def transformer_stack_kernel(x_ref,
                             wq_ref, bq_ref, wk_ref, bk_ref, wv_ref, bv_ref,
                             wo_ref, bo_ref, ln1w_ref, ln1b_ref,
                             w1_ref, b1_ref, w2_ref, b2_ref, ln2w_ref, ln2b_ref,
                             o_ref, *, batch, seq, n_heads, d_k, d_model):
    """grid = (n_layers,).  o_ref (constant block index) carries activations across layers."""
    l = pl.program_id(0)
    B, T, H, dk = batch, seq, n_heads, d_k

    @pl.when(l == 0)
    def _():
        o_ref[...] = x_ref[...]

    x = o_ref[...]                                  # (B*T, D_pad) f32, VMEM-resident carry

    # ---- causal self attention --------------------------------------------
    q = _linear(x, wq_ref[0], bq_ref[0])            # (B*T, H*dk) f32
    k = _linear(x, wk_ref[0], bk_ref[0])
    v = _linear(x, wv_ref[0], bv_ref[0])

    q = q * (1.0 / math.sqrt(dk))                   # fold scale into q (O(T*E), not O(T*T))

    # regroup (B*T, H*dk) -> (B*H, T, dk) with static slices, then batch the heads
    def to_heads(m):
        return jnp.stack(
            [m[b * T:(b + 1) * T, h * dk:(h + 1) * dk]
             for b in range(B) for h in range(H)],
            axis=0).astype(jnp.bfloat16)

    qh, kh, vh = to_heads(q), to_heads(k), to_heads(v)          # (B*H, T, dk) bf16

    s = jnp.einsum('bqd,bkd->bqk', qh, kh,
                   preferred_element_type=jnp.float32)           # (B*H, T, T) f32
    row = lax.broadcasted_iota(jnp.int32, (T, T), 0)
    col = lax.broadcasted_iota(jnp.int32, (T, T), 1)
    s = jnp.where((row >= col)[None], s, -1e30)                  # causal mask (f32 constant)

    m_ = jnp.max(s, axis=-1, keepdims=True)
    p = jnp.exp(s - m_)
    denom = jnp.sum(p, axis=-1, keepdims=True)
    p = p * pl.reciprocal(denom, approx=True)                    # EUP reciprocal + VPU mul

    a = jnp.einsum('bqk,bkd->bqd', p.astype(jnp.bfloat16), vh,
                   preferred_element_type=jnp.float32)           # (B*H, T, dk) f32

    # regroup back to (B*T, H*dk)
    attn = jnp.concatenate(
        [jnp.concatenate([a[b * H + h] for h in range(H)], axis=-1) for b in range(B)],
        axis=0)

    mha = _linear(attn, wo_ref[0], bo_ref[0])                    # (B*T, D_pad)
    x1 = _layer_norm_masked(x + mha, ln1w_ref[0], ln1b_ref[0], d_model)

    # ---- feed-forward -------------------------------------------------------
    h1 = _gelu_exact(_linear(x1, w1_ref[0], b1_ref[0]))          # (B*T, 4D_pad)
    h2 = _linear(h1, w2_ref[0], b2_ref[0])                       # (B*T, D_pad)
    x2 = _layer_norm_masked(x1 + h2, ln2w_ref[0], ln2b_ref[0], d_model)

    o_ref[...] = x2


def final_head_kernel(x_ref, lnw_ref, lnb_ref, wfc_ref, bfc_ref, o_ref, *, d_model):
    """grid = (V_pad // tile_v,).  Lane-dense (B*T, tile_v) output tiles."""
    x = _layer_norm_masked(x_ref[...], lnw_ref[...], lnb_ref[...], d_model)
    o_ref[...] = jnp.dot(x.astype(jnp.bfloat16), wfc_ref[...],
                         preferred_element_type=jnp.float32) + bfc_ref[...]


# ----------------------------- pallas_call wrappers ---------------------------

def run_transformer_stack(x2d, stacked, *, batch, seq, n_heads, d_k, d_model):
    BT, Dp = x2d.shape
    names = ["wq", "bq", "wk", "bk", "wv", "bv", "wo", "bo", "ln1w", "ln1b",
             "w1", "b1", "w2", "b2", "ln2w", "ln2b"]
    weights = [stacked[n] for n in names]
    L = weights[0].shape[0]
    E = weights[0].shape[2]
    Hidp = stacked["w1"].shape[2]
    BH = batch * n_heads

    def layer_spec(arr):
        blk = (1,) + tuple(arr.shape[1:])
        return pl.BlockSpec(blk, lambda l: (l, 0, 0))

    in_specs = [pl.BlockSpec((BT, Dp), lambda l: (0, 0))] + [layer_spec(w) for w in weights]

    flops_layer = (3 * 2 * BT * Dp * E                    # q/k/v projections
                   + 2 * 2 * BH * seq * seq * d_k         # QK^T + P@V
                   + 2 * BT * E * Dp                      # output projection
                   + 2 * BT * Dp * Hidp + 2 * BT * Hidp * Dp)  # FFN
    transc_layer = BH * seq * seq + BT * Hidp             # exp + erf
    bytes_total = int(2 * x2d.size * x2d.dtype.itemsize
                      + sum(int(w.size) * w.dtype.itemsize for w in weights))

    kernel = functools.partial(transformer_stack_kernel, batch=batch, seq=seq,
                               n_heads=n_heads, d_k=d_k, d_model=d_model)
    return pl.pallas_call(
        kernel,
        out_shape=jax.ShapeDtypeStruct((BT, Dp), jnp.float32),
        grid=(L,),
        in_specs=in_specs,
        out_specs=pl.BlockSpec((BT, Dp), lambda l: (0, 0)),
        compiler_params=pltpu.CompilerParams(dimension_semantics=("arbitrary",)),
        cost_estimate=pl.CostEstimate(flops=int(L * flops_layer),
                                      transcendentals=int(L * transc_layer),
                                      bytes_accessed=bytes_total),
    )(x2d, *weights)


def run_final_head(x2d, head, *, d_model):
    BT, Dp = x2d.shape
    Vp = head["wfc"].shape[1]
    tv = _choose_tile(Vp)
    kernel = functools.partial(final_head_kernel, d_model=d_model)
    bytes_total = int(x2d.nbytes + head["lnw"].nbytes + head["lnb"].nbytes
                      + head["wfc"].nbytes + head["bfc"].nbytes + BT * Vp * 4)
    return pl.pallas_call(
        kernel,
        out_shape=jax.ShapeDtypeStruct((BT, Vp), jnp.float32),
        grid=(Vp // tv,),
        in_specs=[
            pl.BlockSpec((BT, Dp), lambda j: (0, 0)),
            pl.BlockSpec((1, Dp), lambda j: (0, 0)),
            pl.BlockSpec((1, Dp), lambda j: (0, 0)),
            pl.BlockSpec((Dp, tv), lambda j: (0, j)),
            pl.BlockSpec((1, tv), lambda j: (0, j)),
        ],
        out_specs=pl.BlockSpec((BT, tv), lambda j: (0, j)),
        compiler_params=pltpu.CompilerParams(dimension_semantics=("parallel",)),
        cost_estimate=pl.CostEstimate(flops=int(2 * BT * Dp * Vp),
                                      transcendentals=0,
                                      bytes_accessed=bytes_total),
    )(x2d, head["lnw"], head["lnb"], head["wfc"], head["bfc"])


# ----------------------------- parameters & glue ------------------------------

def sinusoidal_pe(max_len, d_model, d_pad):
    position = jnp.arange(max_len, dtype=jnp.float32)[:, None]
    exp_term = jnp.arange(0, d_model, 2, dtype=jnp.float32)
    div_term = jnp.exp(exp_term * (-math.log(10000.0) / d_model))
    pe = jnp.zeros((max_len, d_pad), dtype=jnp.float32)
    pe = pe.at[:, 0:d_model:2].set(jnp.sin(position * div_term))
    pe = pe.at[:, 1:d_model:2].set(jnp.cos(position * div_term))
    return pe[None]  # (1, max_len, d_pad)


def init_params(key, vocab_size, max_len, d_k, d_model, n_heads, n_layers):
    E = d_k * n_heads
    hidden = 4 * d_model
    Dp = _round_up(d_model, 128)
    Hp = _round_up(hidden, 128)
    Vp = _round_up(vocab_size, 128)

    def lin(key, fan_in, fan_out, pad_in, pad_out):
        kw, kb = jax.random.split(key)
        w = jax.random.normal(kw, (fan_in, fan_out), jnp.float32) * (1.0 / math.sqrt(fan_in))
        b = jax.random.normal(kb, (1, fan_out), jnp.float32) * 0.01
        wp = jnp.zeros((pad_in, pad_out), jnp.float32).at[:fan_in, :fan_out].set(w)
        bp = jnp.zeros((1, pad_out), jnp.float32).at[:, :fan_out].set(b)
        return wp.astype(jnp.bfloat16), bp        # weights bf16, biases f32

    def ln_pair():
        w = jnp.zeros((1, Dp), jnp.float32).at[:, :d_model].set(1.0)
        b = jnp.zeros((1, Dp), jnp.float32)
        return w, b

    keys = jax.random.split(key, n_layers + 2)

    emb = jax.random.normal(keys[0], (vocab_size, d_model), jnp.float32) * 0.02
    emb_pad = jnp.zeros((vocab_size, Dp), jnp.float32).at[:, :d_model].set(emb)

    layer_dicts = []
    for li in range(n_layers):
        lk = jax.random.split(keys[1 + li], 6)
        wq, bq = lin(lk[0], d_model, E, Dp, E)
        wk, bk = lin(lk[1], d_model, E, Dp, E)
        wv, bv = lin(lk[2], d_model, E, Dp, E)
        wo, bo = lin(lk[3], E, d_model, E, Dp)
        w1, b1 = lin(lk[4], d_model, hidden, Dp, Hp)
        w2, b2 = lin(lk[5], hidden, d_model, Hp, Dp)
        ln1w, ln1b = ln_pair()
        ln2w, ln2b = ln_pair()
        layer_dicts.append(dict(wq=wq, bq=bq, wk=wk, bk=bk, wv=wv, bv=bv, wo=wo, bo=bo,
                                ln1w=ln1w, ln1b=ln1b, w1=w1, b1=b1, w2=w2, b2=b2,
                                ln2w=ln2w, ln2b=ln2b))
    # stack every per-layer tensor along a leading layer axis -> (L, ...)
    stacked = {name: jnp.stack([ld[name] for ld in layer_dicts], axis=0)
               for name in layer_dicts[0]}

    wfc, bfc = lin(keys[-1], d_model, vocab_size, Dp, Vp)
    lnw, lnb = ln_pair()

    return {
        "embedding": emb_pad,                       # (vocab, D_pad) f32, padded cols zero
        "pe": sinusoidal_pe(max_len, d_model, Dp),  # (1, max_len, D_pad) f32
        "stack": stacked,
        "head": dict(lnw=lnw, lnb=lnb, wfc=wfc, bfc=bfc),
    }


def decoder_forward(tokens, params, *, n_heads, d_k, d_model, vocab_size):
    # embedding lookup + positional encoding (glue; the gather stays in plain JAX)
    B, T = tokens.shape
    x = params["embedding"][tokens] + params["pe"][:, :T, :]    # (B, T, D_pad) f32
    Dp = x.shape[-1]
    x2 = x.reshape(B * T, Dp)                                   # lane-dense slab
    # dropout layers are identity (eval mode)
    x2 = run_transformer_stack(x2, params["stack"], batch=B, seq=T,
                               n_heads=n_heads, d_k=d_k, d_model=d_model)
    logits_pad = run_final_head(x2, params["head"], d_model=d_model)   # (B*T, V_pad)
    return logits_pad.reshape(B, T, -1)[:, :, :vocab_size]


# ----------------------------- main ------------------------------------------

if __name__ == "__main__":
    vocab_size, max_len = 64, 16
    d_k, d_model, n_heads, n_layers = 8, 32, 4, 2
    B, T = 2, 8

    key = jax.random.PRNGKey(0)
    k_tok, k_par = jax.random.split(key)
    tokens = jax.random.randint(k_tok, (B, T), 0, vocab_size, dtype=jnp.int32)
    params = init_params(k_par, vocab_size, max_len, d_k, d_model, n_heads, n_layers)

    logits = decoder_forward(tokens, params, n_heads=n_heads, d_k=d_k,
                             d_model=d_model, vocab_size=vocab_size)
    logits = jax.block_until_ready(logits)

    assert logits.shape == (B, T, vocab_size)
    assert bool(jnp.all(jnp.isfinite(logits)))
    print("KERNEL_OK")
</pallas_src>

<mosaic_0001>
module attributes {stable_mosaic.version = 11 : i64} {
  func.func @transformer_stack_kernel(%arg0: i32, %arg1: memref<16x128xf32, #tpu.memory_space<vmem>>, %arg2: memref<1x128x32xbf16, #tpu.memory_space<vmem>>, %arg3: memref<1x1x32xf32, #tpu.memory_space<vmem>>, %arg4: memref<1x128x32xbf16, #tpu.memory_space<vmem>>, %arg5: memref<1x1x32xf32, #tpu.memory_space<vmem>>, %arg6: memref<1x128x32xbf16, #tpu.memory_space<vmem>>, %arg7: memref<1x1x32xf32, #tpu.memory_space<vmem>>, %arg8: memref<1x32x128xbf16, #tpu.memory_space<vmem>>, %arg9: memref<1x1x128xf32, #tpu.memory_space<vmem>>, %arg10: memref<1x1x128xf32, #tpu.memory_space<vmem>>, %arg11: memref<1x1x128xf32, #tpu.memory_space<vmem>>, %arg12: memref<1x128x128xbf16, #tpu.memory_space<vmem>>, %arg13: memref<1x1x128xf32, #tpu.memory_space<vmem>>, %arg14: memref<1x128x128xbf16, #tpu.memory_space<vmem>>, %arg15: memref<1x1x128xf32, #tpu.memory_space<vmem>>, %arg16: memref<1x1x128xf32, #tpu.memory_space<vmem>>, %arg17: memref<1x1x128xf32, #tpu.memory_space<vmem>>, %arg18: memref<16x128xf32, #tpu.memory_space<vmem>>) attributes {dimension_semantics = [#tpu.dimension_semantics<arbitrary>], iteration_bounds = array<i64: 2>, scalar_prefetch = 0 : i64, scratch_operands = 0 : i64, tpu.core_type = #tpu.core_type<tc>, window_params = [{pipeline_mode = #tpu.pipeline_mode<synchronous>, transform_indices = @transform_0, window_bounds = array<i64: 16, 128>}, {transform_indices = @transform_1, window_bounds = array<i64: 1, 128, 32>}, {transform_indices = @transform_2, window_bounds = array<i64: 1, 1, 32>}, {transform_indices = @transform_3, window_bounds = array<i64: 1, 128, 32>}, {transform_indices = @transform_4, window_bounds = array<i64: 1, 1, 32>}, {transform_indices = @transform_5, window_bounds = array<i64: 1, 128, 32>}, {transform_indices = @transform_6, window_bounds = array<i64: 1, 1, 32>}, {transform_indices = @transform_7, window_bounds = array<i64: 1, 32, 128>}, {transform_indices = @transform_8, window_bounds = array<i64: 1, 1, 128>}, {transform_indices = @transform_9, window_bounds = array<i64: 1, 1, 128>}, {transform_indices = @transform_10, window_bounds = array<i64: 1, 1, 128>}, {transform_indices = @transform_11, window_bounds = array<i64: 1, 128, 128>}, {transform_indices = @transform_12, window_bounds = array<i64: 1, 1, 128>}, {transform_indices = @transform_13, window_bounds = array<i64: 1, 128, 128>}, {transform_indices = @transform_14, window_bounds = array<i64: 1, 1, 128>}, {transform_indices = @transform_15, window_bounds = array<i64: 1, 1, 128>}, {transform_indices = @transform_16, window_bounds = array<i64: 1, 1, 128>}, {pipeline_mode = #tpu.pipeline_mode<synchronous>, transform_indices = @transform_17, window_bounds = array<i64: 16, 128>}]} {
    %c0_i32 = arith.constant 0 : i32
    %0 = arith.cmpi eq, %arg0, %c0_i32 : i32
    %1 = arith.extui %0 : i1 to i32
    %c0_i32_0 = arith.constant 0 : i32
    %2 = arith.cmpi ne, %1, %c0_i32_0 : i32
    scf.if %2 {
      %c0_77 = arith.constant 0 : index
      %c0_78 = arith.constant 0 : index
      %221 = vector.load %arg1[%c0_77, %c0_78] : memref<16x128xf32, #tpu.memory_space<vmem>>, vector<16x128xf32>
      %c0_79 = arith.constant 0 : index
      %c0_80 = arith.constant 0 : index
      %222 = vector.load %arg18[%c0_79, %c0_80] : memref<16x128xf32, #tpu.memory_space<vmem>>, vector<16x128xf32>
      tpu.vector_store %arg18[%c0_79, %c0_80], %221 {strides = array<i32>} : memref<16x128xf32, #tpu.memory_space<vmem>>, vector<16x128xf32>,
    } else {
    }
    %c0 = arith.constant 0 : index
    %c0_1 = arith.constant 0 : index
    %3 = vector.load %arg18[%c0, %c0_1] : memref<16x128xf32, #tpu.memory_space<vmem>>, vector<16x128xf32>
    %c0_2 = arith.constant 0 : index
    %c0_3 = arith.constant 0 : index
    %c0_4 = arith.constant 0 : index
    %4 = vector.load %arg2[%c0_2, %c0_3, %c0_4] : memref<1x128x32xbf16, #tpu.memory_space<vmem>>, vector<1x128x32xbf16>
    %5 = vector.shape_cast %4 : vector<1x128x32xbf16> to vector<128x32xbf16>
    %c0_5 = arith.constant 0 : index
    %c0_6 = arith.constant 0 : index
    %c0_7 = arith.constant 0 : index
    %6 = vector.load %arg3[%c0_5, %c0_6, %c0_7] : memref<1x1x32xf32, #tpu.memory_space<vmem>>, vector<1x1x32xf32>
    %7 = vector.shape_cast %6 : vector<1x1x32xf32> to vector<1x32xf32>
    %8 = arith.truncf %3 : vector<16x128xf32> to vector<16x128xbf16>
    %cst = arith.constant dense<0.000000e+00> : vector<16x32xf32>
    %9 = tpu.matmul %8, %5, %cst {dimension_numbers = #tpu.dot_dimension_numbers<[1], [0], [0], [1], [0, 0, 1, 1], [], []>} : vector<16x128xbf16>, vector<128x32xbf16>, vector<16x32xf32> -> vector<16x32xf32>
    %10 = vector.broadcast %7 : vector<1x32xf32> to vector<16x32xf32>
    %11 = arith.addf %9, %10 : vector<16x32xf32>
    %c0_8 = arith.constant 0 : index
    %c0_9 = arith.constant 0 : index
    %c0_10 = arith.constant 0 : index
    %12 = vector.load %arg4[%c0_8, %c0_9, %c0_10] : memref<1x128x32xbf16, #tpu.memory_space<vmem>>, vector<1x128x32xbf16>
    %13 = vector.shape_cast %12 : vector<1x128x32xbf16> to vector<128x32xbf16>
    %c0_11 = arith.constant 0 : index
    %c0_12 = arith.constant 0 : index
    %c0_13 = arith.constant 0 : index
    %14 = vector.load %arg5[%c0_11, %c0_12, %c0_13] : memref<1x1x32xf32, #tpu.memory_space<vmem>>, vector<1x1x32xf32>
    %15 = vector.shape_cast %14 : vector<1x1x32xf32> to vector<1x32xf32>
    %16 = arith.truncf %3 : vector<16x128xf32> to vector<16x128xbf16>
    %cst_14 = arith.constant dense<0.000000e+00> : vector<16x32xf32>
    %17 = tpu.matmul %16, %13, %cst_14 {dimension_numbers = #tpu.dot_dimension_numbers<[1], [0], [0], [1], [0, 0, 1, 1], [], []>} : vector<16x128xbf16>, vector<128x32xbf16>, vector<16x32xf32> -> vector<16x32xf32>
    %18 = vector.broadcast %15 : vector<1x32xf32> to vector<16x32xf32>
    %19 = arith.addf %17, %18 : vector<16x32xf32>
    %c0_15 = arith.constant 0 : index
    %c0_16 = arith.constant 0 : index
    %c0_17 = arith.constant 0 : index
    %20 = vector.load %arg6[%c0_15, %c0_16, %c0_17] : memref<1x128x32xbf16, #tpu.memory_space<vmem>>, vector<1x128x32xbf16>
    %21 = vector.shape_cast %20 : vector<1x128x32xbf16> to vector<128x32xbf16>
    %c0_18 = arith.constant 0 : index
    %c0_19 = arith.constant 0 : index
    %c0_20 = arith.constant 0 : index
    %22 = vector.load %arg7[%c0_18, %c0_19, %c0_20] : memref<1x1x32xf32, #tpu.memory_space<vmem>>, vector<1x1x32xf32>
    %23 = vector.shape_cast %22 : vector<1x1x32xf32> to vector<1x32xf32>
    %24 = arith.truncf %3 : vector<16x128xf32> to vector<16x128xbf16>
    %cst_21 = arith.constant dense<0.000000e+00> : vector<16x32xf32>
    %25 = tpu.matmul %24, %21, %cst_21 {dimension_numbers = #tpu.dot_dimension_numbers<[1], [0], [0], [1], [0, 0, 1, 1], [], []>} : vector<16x128xbf16>, vector<128x32xbf16>, vector<16x32xf32> -> vector<16x32xf32>
    %26 = vector.broadcast %23 : vector<1x32xf32> to vector<16x32xf32>
    %27 = arith.addf %25, %26 : vector<16x32xf32>
    %cst_22 = arith.constant 0.353553385 : f32
    %28 = vector.broadcast %cst_22 : f32 to vector<16x32xf32>
    %29 = arith.mulf %11, %28 : vector<16x32xf32>
    %30 = vector.extract_strided_slice %29 {offsets = [0, 0], sizes = [8, 8], strides = [1, 1]} : vector<16x32xf32> to vector<8x8xf32>
    %31 = vector.extract_strided_slice %29 {offsets = [0, 8], sizes = [8, 8], strides = [1, 1]} : vector<16x32xf32> to vector<8x8xf32>
    %32 = vector.extract_strided_slice %29 {offsets = [0, 16], sizes = [8, 8], strides = [1, 1]} : vector<16x32xf32> to vector<8x8xf32>
    %33 = vector.extract_strided_slice %29 {offsets = [0, 24], sizes = [8, 8], strides = [1, 1]} : vector<16x32xf32> to vector<8x8xf32>
    %34 = vector.extract_strided_slice %29 {offsets = [8, 0], sizes = [8, 8], strides = [1, 1]} : vector<16x32xf32> to vector<8x8xf32>
    %35 = vector.extract_strided_slice %29 {offsets = [8, 8], sizes = [8, 8], strides = [1, 1]} : vector<16x32xf32> to vector<8x8xf32>
    %36 = vector.extract_strided_slice %29 {offsets = [8, 16], sizes = [8, 8], strides = [1, 1]} : vector<16x32xf32> to vector<8x8xf32>
    %37 = vector.extract_strided_slice %29 {offsets = [8, 24], sizes = [8, 8], strides = [1, 1]} : vector<16x32xf32> to vector<8x8xf32>
    %38 = vector.shape_cast %30 : vector<8x8xf32> to vector<1x8x8xf32>
    %39 = vector.shape_cast %31 : vector<8x8xf32> to vector<1x8x8xf32>
    %40 = vector.shape_cast %32 : vector<8x8xf32> to vector<1x8x8xf32>
    %41 = vector.shape_cast %33 : vector<8x8xf32> to vector<1x8x8xf32>
    %42 = vector.shape_cast %34 : vector<8x8xf32> to vector<1x8x8xf32>
    %43 = vector.shape_cast %35 : vector<8x8xf32> to vector<1x8x8xf32>
    %44 = vector.shape_cast %36 : vector<8x8xf32> to vector<1x8x8xf32>
    %45 = vector.shape_cast %37 : vector<8x8xf32> to vector<1x8x8xf32>
    %46 = tpu.concatenate %38, %39, %40, %41, %42, %43, %44, %45 in 0 : vector<1x8x8xf32>, vector<1x8x8xf32>, vector<1x8x8xf32>, vector<1x8x8xf32>, vector<1x8x8xf32>, vector<1x8x8xf32>, vector<1x8x8xf32>, vector<1x8x8xf32> -> vector<8x8x8xf32>
    %47 = arith.truncf %46 : vector<8x8x8xf32> to vector<8x8x8xbf16>
    %48 = vector.extract_strided_slice %19 {offsets = [0, 0], sizes = [8, 8], strides = [1, 1]} : vector<16x32xf32> to vector<8x8xf32>
    %49 = vector.extract_strided_slice %19 {offsets = [0, 8], sizes = [8, 8], strides = [1, 1]} : vector<16x32xf32> to vector<8x8xf32>
    %50 = vector.extract_strided_slice %19 {offsets = [0, 16], sizes = [8, 8], strides = [1, 1]} : vector<16x32xf32> to vector<8x8xf32>
    %51 = vector.extract_strided_slice %19 {offsets = [0, 24], sizes = [8, 8], strides = [1, 1]} : vector<16x32xf32> to vector<8x8xf32>
    %52 = vector.extract_strided_slice %19 {offsets = [8, 0], sizes = [8, 8], strides = [1, 1]} : vector<16x32xf32> to vector<8x8xf32>
    %53 = vector.extract_strided_slice %19 {offsets = [8, 8], sizes = [8, 8], strides = [1, 1]} : vector<16x32xf32> to vector<8x8xf32>
    %54 = vector.extract_strided_slice %19 {offsets = [8, 16], sizes = [8, 8], strides = [1, 1]} : vector<16x32xf32> to vector<8x8xf32>
    %55 = vector.extract_strided_slice %19 {offsets = [8, 24], sizes = [8, 8], strides = [1, 1]} : vector<16x32xf32> to vector<8x8xf32>
    %56 = vector.shape_cast %48 : vector<8x8xf32> to vector<1x8x8xf32>
    %57 = vector.shape_cast %49 : vector<8x8xf32> to vector<1x8x8xf32>
    %58 = vector.shape_cast %50 : vector<8x8xf32> to vector<1x8x8xf32>
    %59 = vector.shape_cast %51 : vector<8x8xf32> to vector<1x8x8xf32>
    %60 = vector.shape_cast %52 : vector<8x8xf32> to vector<1x8x8xf32>
    %61 = vector.shape_cast %53 : vector<8x8xf32> to vector<1x8x8xf32>
    %62 = vector.shape_cast %54 : vector<8x8xf32> to vector<1x8x8xf32>
    %63 = vector.shape_cast %55 : vector<8x8xf32> to vector<1x8x8xf32>
    %64 = tpu.concatenate %56, %57, %58, %59, %60, %61, %62, %63 in 0 : vector<1x8x8xf32>, vector<1x8x8xf32>, vector<1x8x8xf32>, vector<1x8x8xf32>, vector<1x8x8xf32>, vector<1x8x8xf32>, vector<1x8x8xf32>, vector<1x8x8xf32> -> vector<8x8x8xf32>
    %65 = arith.truncf %64 : vector<8x8x8xf32> to vector<8x8x8xbf16>
    %66 = vector.extract_strided_slice %27 {offsets = [0, 0], sizes = [8, 8], strides = [1, 1]} : vector<16x32xf32> to vector<8x8xf32>
    %67 = vector.extract_strided_slice %27 {offsets = [0, 8], sizes = [8, 8], strides = [1, 1]} : vector<16x32xf32> to vector<8x8xf32>
    %68 = vector.extract_strided_slice %27 {offsets = [0, 16], sizes = [8, 8], strides = [1, 1]} : vector<16x32xf32> to vector<8x8xf32>
    %69 = vector.extract_strided_slice %27 {offsets = [0, 24], sizes = [8, 8], strides = [1, 1]} : vector<16x32xf32> to vector<8x8xf32>
    %70 = vector.extract_strided_slice %27 {offsets = [8, 0], sizes = [8, 8], strides = [1, 1]} : vector<16x32xf32> to vector<8x8xf32>
    %71 = vector.extract_strided_slice %27 {offsets = [8, 8], sizes = [8, 8], strides = [1, 1]} : vector<16x32xf32> to vector<8x8xf32>
    %72 = vector.extract_strided_slice %27 {offsets = [8, 16], sizes = [8, 8], strides = [1, 1]} : vector<16x32xf32> to vector<8x8xf32>
    %73 = vector.extract_strided_slice %27 {offsets = [8, 24], sizes = [8, 8], strides = [1, 1]} : vector<16x32xf32> to vector<8x8xf32>
    %74 = vector.shape_cast %66 : vector<8x8xf32> to vector<1x8x8xf32>
    %75 = vector.shape_cast %67 : vector<8x8xf32> to vector<1x8x8xf32>
    %76 = vector.shape_cast %68 : vector<8x8xf32> to vector<1x8x8xf32>
    %77 = vector.shape_cast %69 : vector<8x8xf32> to vector<1x8x8xf32>
    %78 = vector.shape_cast %70 : vector<8x8xf32> to vector<1x8x8xf32>
    %79 = vector.shape_cast %71 : vector<8x8xf32> to vector<1x8x8xf32>
    %80 = vector.shape_cast %72 : vector<8x8xf32> to vector<1x8x8xf32>
    %81 = vector.shape_cast %73 : vector<8x8xf32> to vector<1x8x8xf32>
    %82 = tpu.concatenate %74, %75, %76, %77, %78, %79, %80, %81 in 0 : vector<1x8x8xf32>, vector<1x8x8xf32>, vector<1x8x8xf32>, vector<1x8x8xf32>, vector<1x8x8xf32>, vector<1x8x8xf32>, vector<1x8x8xf32>, vector<1x8x8xf32> -> vector<8x8x8xf32>
    %83 = arith.truncf %82 : vector<8x8x8xf32> to vector<8x8x8xbf16>
    "tpu.trace_start"() <{level = 10 : i32, message = "bqd,bkd->bqk"}> : () -> ()
    %cst_23 = arith.constant dense<0.000000e+00> : vector<8x8x8xf32>
    %84 = tpu.matmul %47, %65, %cst_23 {dimension_numbers = #tpu.dot_dimension_numbers<[2], [2], [1], [1], [0, 0, 0, 1, 1, 1], [0], [0]>} : vector<8x8x8xbf16>, vector<8x8x8xbf16>, vector<8x8x8xf32> -> vector<8x8x8xf32>
    "tpu.trace_stop"() : () -> ()
    %85 = tpu.iota {dimensions = array<i32: 0>} : vector<8x8xi32>
    %86 = tpu.iota {dimensions = array<i32: 1>} : vector<8x8xi32>
    %87 = arith.cmpi sge, %85, %86 : vector<8x8xi32>
    %88 = vector.shape_cast %87 : vector<8x8xi1> to vector<1x8x8xi1>
    %cst_24 = arith.constant -1.000000e+30 : f32
    %89 = vector.shape_cast %88 : vector<1x8x8xi1> to vector<1x8x8xi1>
    %90 = vector.broadcast %89 : vector<1x8x8xi1> to vector<8x8x8xi1>
    %91 = vector.broadcast %cst_24 : f32 to vector<8x8x8xf32>
    %92 = arith.select %90, %84, %91 : vector<8x8x8xi1>, vector<8x8x8xf32>
    %cst_25 = arith.constant dense<0xFF800000> : vector<8x8xf32>
    %93 = vector.multi_reduction <maximumf>, %92, %cst_25 [2] : vector<8x8x8xf32> to vector<8x8xf32>
    %94 = vector.shape_cast %93 : vector<8x8xf32> to vector<8x8x1xf32>
    %95 = vector.broadcast %94 : vector<8x8x1xf32> to vector<8x8x8xf32>
    %96 = arith.subf %92, %95 : vector<8x8x8xf32>
    %97 = math.exp %96 : vector<8x8x8xf32>
    %cst_26 = arith.constant dense<0.000000e+00> : vector<8x8xf32>
    %98 = vector.multi_reduction <add>, %97, %cst_26 [2] : vector<8x8x8xf32> to vector<8x8xf32>
    %99 = vector.shape_cast %98 : vector<8x8xf32> to vector<8x8x1xf32>
    %100 = tpu.reciprocal %99 {approx = true} : vector<8x8x1xf32> -> vector<8x8x1xf32>
    %101 = vector.broadcast %100 : vector<8x8x1xf32> to vector<8x8x8xf32>
    %102 = arith.mulf %97, %101 : vector<8x8x8xf32>
    %103 = arith.truncf %102 : vector<8x8x8xf32> to vector<8x8x8xbf16>
    "tpu.trace_start"() <{level = 10 : i32, message = "bqk,bkd->bqd"}> : () -> ()
    %cst_27 = arith.constant dense<0.000000e+00> : vector<8x8x8xf32>
    %104 = tpu.matmul %103, %83, %cst_27 {dimension_numbers = #tpu.dot_dimension_numbers<[2], [1], [1], [2], [0, 0, 0, 1, 1, 2], [0], [0]>} : vector<8x8x8xbf16>, vector<8x8x8xbf16>, vector<8x8x8xf32> -> vector<8x8x8xf32>
    "tpu.trace_stop"() : () -> ()
    %105 = vector.extract_strided_slice %104 {offsets = [0, 0, 0], sizes = [1, 8, 8], strides = [1, 1, 1]} : vector<8x8x8xf32> to vector<1x8x8xf32>
    %106 = vector.shape_cast %105 : vector<1x8x8xf32> to vector<8x8xf32>
    %107 = vector.extract_strided_slice %104 {offsets = [1, 0, 0], sizes = [1, 8, 8], strides = [1, 1, 1]} : vector<8x8x8xf32> to vector<1x8x8xf32>
    %108 = vector.shape_cast %107 : vector<1x8x8xf32> to vector<8x8xf32>
    %109 = vector.extract_strided_slice %104 {offsets = [2, 0, 0], sizes = [1, 8, 8], strides = [1, 1, 1]} : vector<8x8x8xf32> to vector<1x8x8xf32>
    %110 = vector.shape_cast %109 : vector<1x8x8xf32> to vector<8x8xf32>
    %111 = vector.extract_strided_slice %104 {offsets = [3, 0, 0], sizes = [1, 8, 8], strides = [1, 1, 1]} : vector<8x8x8xf32> to vector<1x8x8xf32>
    %112 = vector.shape_cast %111 : vector<1x8x8xf32> to vector<8x8xf32>
    %113 = tpu.concatenate %106, %108, %110, %112 in 1 : vector<8x8xf32>, vector<8x8xf32>, vector<8x8xf32>, vector<8x8xf32> -> vector<8x32xf32>
    %114 = vector.extract_strided_slice %104 {offsets = [4, 0, 0], sizes = [1, 8, 8], strides = [1, 1, 1]} : vector<8x8x8xf32> to vector<1x8x8xf32>
    %115 = vector.shape_cast %114 : vector<1x8x8xf32> to vector<8x8xf32>
    %116 = vector.extract_strided_slice %104 {offsets = [5, 0, 0], sizes = [1, 8, 8], strides = [1, 1, 1]} : vector<8x8x8xf32> to vector<1x8x8xf32>
    %117 = vector.shape_cast %116 : vector<1x8x8xf32> to vector<8x8xf32>
    %118 = vector.extract_strided_slice %104 {offsets = [6, 0, 0], sizes = [1, 8, 8], strides = [1, 1, 1]} : vector<8x8x8xf32> to vector<1x8x8xf32>
    %119 = vector.shape_cast %118 : vector<1x8x8xf32> to vector<8x8xf32>
    %120 = vector.extract_strided_slice %104 {offsets = [7, 0, 0], sizes = [1, 8, 8], strides = [1, 1, 1]} : vector<8x8x8xf32> to vector<1x8x8xf32>
    %121 = vector.shape_cast %120 : vector<1x8x8xf32> to vector<8x8xf32>
    %122 = tpu.concatenate %115, %117, %119, %121 in 1 : vector<8x8xf32>, vector<8x8xf32>, vector<8x8xf32>, vector<8x8xf32> -> vector<8x32xf32>
    %123 = tpu.concatenate %113, %122 in 0 : vector<8x32xf32>, vector<8x32xf32> -> vector<16x32xf32>
    %c0_28 = arith.constant 0 : index
    %c0_29 = arith.constant 0 : index
    %c0_30 = arith.constant 0 : index
    %124 = vector.load %arg8[%c0_28, %c0_29, %c0_30] : memref<1x32x128xbf16, #tpu.memory_space<vmem>>, vector<1x32x128xbf16>
    %125 = vector.shape_cast %124 : vector<1x32x128xbf16> to vector<32x128xbf16>
    %c0_31 = arith.constant 0 : index
    %c0_32 = arith.constant 0 : index
    %c0_33 = arith.constant 0 : index
    %126 = vector.load %arg9[%c0_31, %c0_32, %c0_33] : memref<1x1x128xf32, #tpu.memory_space<vmem>>, vector<1x1x128xf32>
    %127 = vector.shape_cast %126 : vector<1x1x128xf32> to vector<1x128xf32>
    %128 = arith.truncf %123 : vector<16x32xf32> to vector<16x32xbf16>
    %cst_34 = arith.constant dense<0.000000e+00> : vector<16x128xf32>
    %129 = tpu.matmul %128, %125, %cst_34 {dimension_numbers = #tpu.dot_dimension_numbers<[1], [0], [0], [1], [0, 0, 1, 1], [], []>} : vector<16x32xbf16>, vector<32x128xbf16>, vector<16x128xf32> -> vector<16x128xf32>
    %130 = vector.broadcast %127 : vector<1x128xf32> to vector<16x128xf32>
    %131 = arith.addf %129, %130 : vector<16x128xf32>
    %132 = arith.addf %3, %131 : vector<16x128xf32>
    %c0_35 = arith.constant 0 : index
    %c0_36 = arith.constant 0 : index
    %c0_37 = arith.constant 0 : index
    %133 = vector.load %arg10[%c0_35, %c0_36, %c0_37] : memref<1x1x128xf32, #tpu.memory_space<vmem>>, vector<1x1x128xf32>
    %134 = vector.shape_cast %133 : vector<1x1x128xf32> to vector<1x128xf32>
    %c0_38 = arith.constant 0 : index
    %c0_39 = arith.constant 0 : index
    %c0_40 = arith.constant 0 : index
    %135 = vector.load %arg11[%c0_38, %c0_39, %c0_40] : memref<1x1x128xf32, #tpu.memory_space<vmem>>, vector<1x1x128xf32>
    %136 = vector.shape_cast %135 : vector<1x1x128xf32> to vector<1x128xf32>
    %137 = tpu.iota {dimensions = array<i32: 1>} : vector<1x128xi32>
    %c32_i32 = arith.constant 32 : i32
    %138 = vector.broadcast %c32_i32 : i32 to vector<1x128xi32>
    %139 = arith.cmpi slt, %137, %138 : vector<1x128xi32>
    %140 = arith.extui %139 : vector<1x128xi1> to vector<1x128xi32>
    %141 = arith.sitofp %140 : vector<1x128xi32> to vector<1x128xf32>
    %cst_41 = arith.constant dense<0.000000e+00> : vector<16xf32>
    %142 = vector.multi_reduction <add>, %132, %cst_41 [1] : vector<16x128xf32> to vector<16xf32>
    %143 = vector.shape_cast %142 : vector<16xf32> to vector<16x1xf32>
    %cst_42 = arith.constant 3.125000e-02 : f32
    %144 = vector.broadcast %cst_42 : f32 to vector<16x1xf32>
    %145 = arith.mulf %143, %144 : vector<16x1xf32>
    %146 = vector.broadcast %145 : vector<16x1xf32> to vector<16x128xf32>
    %147 = arith.subf %132, %146 : vector<16x128xf32>
    %148 = vector.broadcast %141 : vector<1x128xf32> to vector<16x128xf32>
    %149 = arith.mulf %147, %148 : vector<16x128xf32>
    %150 = arith.mulf %149, %149 : vector<16x128xf32>
    %cst_43 = arith.constant dense<0.000000e+00> : vector<16xf32>
    %151 = vector.multi_reduction <add>, %150, %cst_43 [1] : vector<16x128xf32> to vector<16xf32>
    %152 = vector.shape_cast %151 : vector<16xf32> to vector<16x1xf32>
    %cst_44 = arith.constant 3.125000e-02 : f32
    %153 = vector.broadcast %cst_44 : f32 to vector<16x1xf32>
    %154 = arith.mulf %152, %153 : vector<16x1xf32>
    %cst_45 = arith.constant 9.99999974E-6 : f32
    %155 = vector.broadcast %cst_45 : f32 to vector<16x1xf32>
    %156 = arith.addf %154, %155 : vector<16x1xf32>
    %157 = math.rsqrt %156 : vector<16x1xf32>
    %158 = vector.broadcast %157 : vector<16x1xf32> to vector<16x128xf32>
    %159 = arith.mulf %149, %158 : vector<16x128xf32>
    %160 = vector.broadcast %134 : vector<1x128xf32> to vector<16x128xf32>
    %161 = arith.mulf %159, %160 : vector<16x128xf32>
    %162 = vector.broadcast %136 : vector<1x128xf32> to vector<16x128xf32>
    %163 = arith.addf %161, %162 : vector<16x128xf32>
    %c0_46 = arith.constant 0 : index
    %c0_47 = arith.constant 0 : index
    %c0_48 = arith.constant 0 : index
    %164 = vector.load %arg12[%c0_46, %c0_47, %c0_48] : memref<1x128x128xbf16, #tpu.memory_space<vmem>>, vector<1x128x128xbf16>
    %165 = vector.shape_cast %164 : vector<1x128x128xbf16> to vector<128x128xbf16>
    %c0_49 = arith.constant 0 : index
    %c0_50 = arith.constant 0 : index
    %c0_51 = arith.constant 0 : index
    %166 = vector.load %arg13[%c0_49, %c0_50, %c0_51] : memref<1x1x128xf32, #tpu.memory_space<vmem>>, vector<1x1x128xf32>
    %167 = vector.shape_cast %166 : vector<1x1x128xf32> to vector<1x128xf32>
    %168 = arith.truncf %163 : vector<16x128xf32> to vector<16x128xbf16>
    %cst_52 = arith.constant dense<0.000000e+00> : vector<16x128xf32>
    %169 = tpu.matmul %168, %165, %cst_52 {dimension_numbers = #tpu.dot_dimension_numbers<[1], [0], [0], [1], [0, 0, 1, 1], [], []>} : vector<16x128xbf16>, vector<128x128xbf16>, vector<16x128xf32> -> vector<16x128xf32>
    %170 = vector.broadcast %167 : vector<1x128xf32> to vector<16x128xf32>
    %171 = arith.addf %169, %170 : vector<16x128xf32>
    %cst_53 = arith.constant 5.000000e-01 : f32
    %172 = vector.broadcast %cst_53 : f32 to vector<16x128xf32>
    %173 = arith.mulf %172, %171 : vector<16x128xf32>
    %cst_54 = arith.constant 0.707106769 : f32
    %174 = vector.broadcast %cst_54 : f32 to vector<16x128xf32>
    %175 = arith.mulf %171, %174 : vector<16x128xf32>
    %176 = math.erf %175 : vector<16x128xf32>
    %cst_55 = arith.constant 1.000000e+00 : f32
    %177 = vector.broadcast %cst_55 : f32 to vector<16x128xf32>
    %178 = arith.addf %177, %176 : vector<16x128xf32>
    %179 = arith.mulf %173, %178 : vector<16x128xf32>
    %c0_56 = arith.constant 0 : index
    %c0_57 = arith.constant 0 : index
    %c0_58 = arith.constant 0 : index
    %180 = vector.load %arg14[%c0_56, %c0_57, %c0_58] : memref<1x128x128xbf16, #tpu.memory_space<vmem>>, vector<1x128x128xbf16>
    %181 = vector.shape_cast %180 : vector<1x128x128xbf16> to vector<128x128xbf16>
    %c0_59 = arith.constant 0 : index
    %c0_60 = arith.constant 0 : index
    %c0_61 = arith.constant 0 : index
    %182 = vector.load %arg15[%c0_59, %c0_60, %c0_61] : memref<1x1x128xf32, #tpu.memory_space<vmem>>, vector<1x1x128xf32>
    %183 = vector.shape_cast %182 : vector<1x1x128xf32> to vector<1x128xf32>
    %184 = arith.truncf %179 : vector<16x128xf32> to vector<16x128xbf16>
    %cst_62 = arith.constant dense<0.000000e+00> : vector<16x128xf32>
    %185 = tpu.matmul %184, %181, %cst_62 {dimension_numbers = #tpu.dot_dimension_numbers<[1], [0], [0], [1], [0, 0, 1, 1], [], []>} : vector<16x128xbf16>, vector<128x128xbf16>, vector<16x128xf32> -> vector<16x128xf32>
    %186 = vector.broadcast %183 : vector<1x128xf32> to vector<16x128xf32>
    %187 = arith.addf %185, %186 : vector<16x128xf32>
    %188 = arith.addf %163, %187 : vector<16x128xf32>
    %c0_63 = arith.constant 0 : index
    %c0_64 = arith.constant 0 : index
    %c0_65 = arith.constant 0 : index
    %189 = vector.load %arg16[%c0_63, %c0_64, %c0_65] : memref<1x1x128xf32, #tpu.memory_space<vmem>>, vector<1x1x128xf32>
    %190 = vector.shape_cast %189 : vector<1x1x128xf32> to vector<1x128xf32>
    %c0_66 = arith.constant 0 : index
    %c0_67 = arith.constant 0 : index
    %c0_68 = arith.constant 0 : index
    %191 = vector.load %arg17[%c0_66, %c0_67, %c0_68] : memref<1x1x128xf32, #tpu.memory_space<vmem>>, vector<1x1x128xf32>
    %192 = vector.shape_cast %191 : vector<1x1x128xf32> to vector<1x128xf32>
    %193 = tpu.iota {dimensions = array<i32: 1>} : vector<1x128xi32>
    %c32_i32_69 = arith.constant 32 : i32
    %194 = vector.broadcast %c32_i32_69 : i32 to vector<1x128xi32>
    %195 = arith.cmpi slt, %193, %194 : vector<1x128xi32>
    %196 = arith.extui %195 : vector<1x128xi1> to vector<1x128xi32>
    %197 = arith.sitofp %196 : vector<1x128xi32> to vector<1x128xf32>
    %cst_70 = arith.constant dense<0.000000e+00> : vector<16xf32>
    %198 = vector.multi_reduction <add>, %188, %cst_70 [1] : vector<16x128xf32> to vector<16xf32>
    %199 = vector.shape_cast %198 : vector<16xf32> to vector<16x1xf32>
    %cst_71 = arith.constant 3.125000e-02 : f32
    %200 = vector.broadcast %cst_71 : f32 to vector<16x1xf32>
    %201 = arith.mulf %199, %200 : vector<16x1xf32>
    %202 = vector.broadcast %201 : vector<16x1xf32> to vector<16x128xf32>
    %203 = arith.subf %188, %202 : vector<16x128xf32>
    %204 = vector.broadcast %197 : vector<1x128xf32> to vector<16x128xf32>
    %205 = arith.mulf %203, %204 : vector<16x128xf32>
    %206 = arith.mulf %205, %205 : vector<16x128xf32>
    %cst_72 = arith.constant dense<0.000000e+00> : vector<16xf32>
    %207 = vector.multi_reduction <add>, %206, %cst_72 [1] : vector<16x128xf32> to vector<16xf32>
    %208 = vector.shape_cast %207 : vector<16xf32> to vector<16x1xf32>
    %cst_73 = arith.constant 3.125000e-02 : f32
    %209 = vector.broadcast %cst_73 : f32 to vector<16x1xf32>
    %210 = arith.mulf %208, %209 : vector<16x1xf32>
    %cst_74 = arith.constant 9.99999974E-6 : f32
    %211 = vector.broadcast %cst_74 : f32 to vector<16x1xf32>
    %212 = arith.addf %210, %211 : vector<16x1xf32>
    %213 = math.rsqrt %212 : vector<16x1xf32>
    %214 = vector.broadcast %213 : vector<16x1xf32> to vector<16x128xf32>
    %215 = arith.mulf %205, %214 : vector<16x128xf32>
    %216 = vector.broadcast %190 : vector<1x128xf32> to vector<16x128xf32>
    %217 = arith.mulf %215, %216 : vector<16x128xf32>
    %218 = vector.broadcast %192 : vector<1x128xf32> to vector<16x128xf32>
    %219 = arith.addf %217, %218 : vector<16x128xf32>
    %c0_75 = arith.constant 0 : index
    %c0_76 = arith.constant 0 : index
    %220 = vector.load %arg18[%c0_75, %c0_76] : memref<16x128xf32, #tpu.memory_space<vmem>>, vector<16x128xf32>
    tpu.vector_store %arg18[%c0_75, %c0_76], %219 {strides = array<i32>} : memref<16x128xf32, #tpu.memory_space<vmem>>, vector<16x128xf32>,
    return
  }
  func.func @transform_0(%arg0: i32) -> (i32, i32) {
    %c0_i32 = arith.constant 0 : i32
    %c0_i32_0 = arith.constant 0 : i32
    %c0_i32_1 = arith.constant 0 : i32
    return %c0_i32, %c0_i32_0 : i32, i32
  }
  func.func @transform_1(%arg0: i32) -> (i32, i32, i32) {
    %c0_i32 = arith.constant 0 : i32
    %c0_i32_0 = arith.constant 0 : i32
    %c0_i32_1 = arith.constant 0 : i32
    return %arg0, %c0_i32, %c0_i32_0 : i32, i32, i32
  }
  func.func @transform_2(%arg0: i32) -> (i32, i32, i32) {
    %c0_i32 = arith.constant 0 : i32
    %c0_i32_0 = arith.constant 0 : i32
    %c0_i32_1 = arith.constant 0 : i32
    return %arg0, %c0_i32, %c0_i32_0 : i32, i32, i32
  }
  func.func @transform_3(%arg0: i32) -> (i32, i32, i32) {
    %c0_i32 = arith.constant 0 : i32
    %c0_i32_0 = arith.constant 0 : i32
    %c0_i32_1 = arith.constant 0 : i32
    return %arg0, %c0_i32, %c0_i32_0 : i32, i32, i32
  }
  func.func @transform_4(%arg0: i32) -> (i32, i32, i32) {
    %c0_i32 = arith.constant 0 : i32
    %c0_i32_0 = arith.constant 0 : i32
    %c0_i32_1 = arith.constant 0 : i32
    return %arg0, %c0_i32, %c0_i32_0 : i32, i32, i32
  }
  func.func @transform_5(%arg0: i32) -> (i32, i32, i32) {
    %c0_i32 = arith.constant 0 : i32
    %c0_i32_0 = arith.constant 0 : i32
    %c0_i32_1 = arith.constant 0 : i32
    return %arg0, %c0_i32, %c0_i32_0 : i32, i32, i32
  }
  func.func @transform_6(%arg0: i32) -> (i32, i32, i32) {
    %c0_i32 = arith.constant 0 : i32
    %c0_i32_0 = arith.constant 0 : i32
    %c0_i32_1 = arith.constant 0 : i32
    return %arg0, %c0_i32, %c0_i32_0 : i32, i32, i32
  }
  func.func @transform_7(%arg0: i32) -> (i32, i32, i32) {
    %c0_i32 = arith.constant 0 : i32
    %c0_i32_0 = arith.constant 0 : i32
    %c0_i32_1 = arith.constant 0 : i32
    return %arg0, %c0_i32, %c0_i32_0 : i32, i32, i32
  }
  func.func @transform_8(%arg0: i32) -> (i32, i32, i32) {
    %c0_i32 = arith.constant 0 : i32
    %c0_i32_0 = arith.constant 0 : i32
    %c0_i32_1 = arith.constant 0 : i32
    return %arg0, %c0_i32, %c0_i32_0 : i32, i32, i32
  }
  func.func @transform_9(%arg0: i32) -> (i32, i32, i32) {
    %c0_i32 = arith.constant 0 : i32
    %c0_i32_0 = arith.constant 0 : i32
    %c0_i32_1 = arith.constant 0 : i32
    return %arg0, %c0_i32, %c0_i32_0 : i32, i32, i32
  }
  func.func @transform_10(%arg0: i32) -> (i32, i32, i32) {
    %c0_i32 = arith.constant 0 : i32
    %c0_i32_0 = arith.constant 0 : i32
    %c0_i32_1 = arith.constant 0 : i32
    return %arg0, %c0_i32, %c0_i32_0 : i32, i32, i32
  }
  func.func @transform_11(%arg0: i32) -> (i32, i32, i32) {
    %c0_i32 = arith.constant 0 : i32
    %c0_i32_0 = arith.constant 0 : i32
    %c0_i32_1 = arith.constant 0 : i32
    return %arg0, %c0_i32, %c0_i32_0 : i32, i32, i32
  }
  func.func @transform_12(%arg0: i32) -> (i32, i32, i32) {
    %c0_i32 = arith.constant 0 : i32
    %c0_i32_0 = arith.constant 0 : i32
    %c0_i32_1 = arith.constant 0 : i32
    return %arg0, %c0_i32, %c0_i32_0 : i32, i32, i32
  }
  func.func @transform_13(%arg0: i32) -> (i32, i32, i32) {
    %c0_i32 = arith.constant 0 : i32
    %c0_i32_0 = arith.constant 0 : i32
    %c0_i32_1 = arith.constant 0 : i32
    return %arg0, %c0_i32, %c0_i32_0 : i32, i32, i32
  }
  func.func @transform_14(%arg0: i32) -> (i32, i32, i32) {
    %c0_i32 = arith.constant 0 : i32
    %c0_i32_0 = arith.constant 0 : i32
    %c0_i32_1 = arith.constant 0 : i32
    return %arg0, %c0_i32, %c0_i32_0 : i32, i32, i32
  }
  func.func @transform_15(%arg0: i32) -> (i32, i32, i32) {
    %c0_i32 = arith.constant 0 : i32
    %c0_i32_0 = arith.constant 0 : i32
    %c0_i32_1 = arith.constant 0 : i32
    return %arg0, %c0_i32, %c0_i32_0 : i32, i32, i32
  }
  func.func @transform_16(%arg0: i32) -> (i32, i32, i32) {
    %c0_i32 = arith.constant 0 : i32
    %c0_i32_0 = arith.constant 0 : i32
    %c0_i32_1 = arith.constant 0 : i32
    return %arg0, %c0_i32, %c0_i32_0 : i32, i32, i32
  }
  func.func @transform_17(%arg0: i32) -> (i32, i32) {
    %c0_i32 = arith.constant 0 : i32
    %c0_i32_0 = arith.constant 0 : i32
    %c0_i32_1 = arith.constant 0 : i32
    return %c0_i32, %c0_i32_0 : i32, i32
  }
}

</mosaic_0001>

<llo_original>
// kernel: tpu_custom_call.1
$region0: #{tpu_custom_call.1}
  #allocation0 [shape = 'u32[]', space=smem, size = 0x4, offset = 0x4, fixed_abs, tag = 'smem constant byte address 0x4 - core index']
  #allocation1 [shape = 'u32[144,128]{1,0:T(1,128)}', space=vmem, size = 0x12000, scoped, tag = 'internal scratch']
  %s0 = inlined_call_operand.vmem [shape: f32[16,128], index: 0, kind: input, shape index: {}]
  %s1 = inlined_call_operand.vmem [shape: bf16[2,128,32], index: 1, kind: input, shape index: {}]
  %s2 = inlined_call_operand.vmem [shape: f32[2,1,32], index: 2, kind: input, shape index: {}]
  %s3 = inlined_call_operand.vmem [shape: bf16[2,128,32], index: 3, kind: input, shape index: {}]
  %s4 = inlined_call_operand.vmem [shape: f32[2,1,32], index: 4, kind: input, shape index: {}]
  %s5 = inlined_call_operand.vmem [shape: bf16[2,128,32], index: 5, kind: input, shape index: {}]
  %s6 = inlined_call_operand.vmem [shape: f32[2,1,32], index: 6, kind: input, shape index: {}]
  %s7 = inlined_call_operand.vmem [shape: bf16[2,32,128], index: 7, kind: input, shape index: {}]
  %s8 = inlined_call_operand.vmem [shape: f32[2,1,128], index: 8, kind: input, shape index: {}]
  %s9 = inlined_call_operand.vmem [shape: f32[2,1,128], index: 9, kind: input, shape index: {}]
  %s10 = inlined_call_operand.vmem [shape: f32[2,1,128], index: 10, kind: input, shape index: {}]
  %s11 = inlined_call_operand.vmem [shape: bf16[2,128,128], index: 11, kind: input, shape index: {}]
  %s12 = inlined_call_operand.vmem [shape: f32[2,1,128], index: 12, kind: input, shape index: {}]
  %s13 = inlined_call_operand.vmem [shape: bf16[2,128,128], index: 13, kind: input, shape index: {}]
  %s14 = inlined_call_operand.vmem [shape: f32[2,1,128], index: 14, kind: input, shape index: {}]
  %s15 = inlined_call_operand.vmem [shape: f32[2,1,128], index: 15, kind: input, shape index: {}]
  %s16 = inlined_call_operand.vmem [shape: f32[2,1,128], index: 16, kind: input, shape index: {}]
  %s17 = inlined_call_operand.hbm [shape: f32[16,128], index: 17, kind: output, shape index: {}]
  %s18 = sld [smem:[#allocation0]]
  $region105: #{tpu_custom_call.1} parent=0
    _
  %s20 = ssub.s32 1, %s18
  %s21 = scalar_select 0, %s20, %s18
  $region1: #{tpu_custom_call.1} parent=0
    #allocation2 [shape = 'u8[8192]{0}', space=vmem, size = 0x2000, scoped, tag = 'output window, operand 0, single buffered']
    #allocation3 [shape = 's32[2]{0}', space=sflag, size = 0x8, scoped, tag = 'scoped memory for tpu_custom_call.1']
    %22 = vsyncpa [#allocation3], 0
    loop: start=0, step=1, limit=4
    $region2: #{tpu_custom_call.1} parent=1 // loop_pre_header
      _
    $region3: #{tpu_custom_call.1} parent=1 // loop_header
      %s24 = sphi 0, %s28
      %p25 = scmp.ge.s32.totalorder %s24, 4
      %s32 = sphi 0, %s32
      %s34 = sphi 0, %s32
      %s35 = sphi 0, %s34
      %s49 = sphi 0, %s35
      %s55 = sphi 0, %s57
      %s58 = sphi 0, %s55
      %s59 = sphi 0, %s58
      %s75 = sphi 0, %s59
      %s81 = sphi 0, %s83
      %s84 = sphi 0, %s81
      %s85 = sphi 0, %s84
      %s101 = sphi 0, %s85
      %s107 = sphi 0, %s109
      %s110 = sphi 0, %s107
      %s111 = sphi 0, %s110
      %s127 = sphi 0, %s111
      %s133 = sphi 0, %s135
      %s136 = sphi 0, %s133
      %s137 = sphi 0, %s136
      %s153 = sphi 0, %s137
      %s159 = sphi 0, %s161
      %s162 = sphi 0, %s159
      %s163 = sphi 0, %s162
      %s179 = sphi 0, %s163
      %s185 = sphi 0, %s187
      %s188 = sphi 0, %s185
      %s189 = sphi 0, %s188
      %s205 = sphi 0, %s189
      %s211 = sphi 0, %s213
      %s214 = sphi 0, %s211
      %s215 = sphi 0, %s214
      %s231 = sphi 0, %s215
      %s237 = sphi 0, %s239
      %s240 = sphi 0, %s237
      %s241 = sphi 0, %s240
      %s257 = sphi 0, %s241
      %s263 = sphi 0, %s265
      %s266 = sphi 0, %s263
      %s267 = sphi 0, %s266
      %s283 = sphi 0, %s267
      %s289 = sphi 0, %s291
      %s292 = sphi 0, %s289
      %s293 = sphi 0, %s292
      %s309 = sphi 0, %s293
      %s315 = sphi 0, %s317
      %s318 = sphi 0, %s315
      %s319 = sphi 0, %s318
      %s335 = sphi 0, %s319
      %s341 = sphi 0, %s343
      %s344 = sphi 0, %s341
      %s345 = sphi 0, %s344
      %s361 = sphi 0, %s345
      %s367 = sphi 0, %s369
      %s370 = sphi 0, %s367
      %s371 = sphi 0, %s370
      %s387 = sphi 0, %s371
      %s393 = sphi 0, %s395
      %s396 = sphi 0, %s393
      %s397 = sphi 0, %s396
      %s413 = sphi 0, %s397
      %s419 = sphi 0, %s421
      %s422 = sphi 0, %s419
      %s423 = sphi 0, %s422
      %s439 = sphi 0, %s423
      %s445 = sphi 0, %s447
      %s448 = sphi 0, %s445
      %s449 = sphi 0, %s448
      %s465 = sphi 0, %s449
      %s469 = sphi 0, %s469
      %s471 = sphi 0, %s469
      %s472 = sphi 0, %s471
      %s486 = sphi 0, %s472
    $region4: #{tpu_custom_call.1} parent=1 // loop_header_branch
      %27 = sbr.rel (%p25) target = $region8
    $region5: #{tpu_custom_call.1} parent=1 // loop_body
      %s29 = ssub.s32 %s24, 1
      %s30 = ssub.s32 %s24, 2
      %s31 = sadd.s32 %s24, 1
      %s33 = sadd.s32 %s32, 1
      %p36 = scmp.eq.s32.totalorder %s24, 1
      %p37 = scmp.ne.s32.totalorder %s32, %s34
      %p38 = scmp.eq.s32.totalorder %s24, 0
      %p39 = por %p37, %p38
      %p40 = scmp.ne.s32.totalorder %s32, %s34
      %p41 = scmp.eq.s32.totalorder %s29, 1
      %p42 = por %p40, %p41
      %p43 = scmp.ne.s32.totalorder %s34, %s35
      %p44 = scmp.eq.s32.totalorder %s29, 0
      %p45 = por %p43, %p44
      %p46 = scmp.ne.s32.totalorder %s34, %s35
      %p47 = scmp.eq.s32.totalorder %s30, 1
      %p48 = por %p46, %p47
      %p50 = scmp.ne.s32.totalorder %s35, %s49
      %p51 = scmp.eq.s32.totalorder %s30, 0
      %p52 = por %p50, %p51
      %s53 = ssub.s32 %s24, %s31
      %p54 = scmp.eq.s32.totalorder %s53, 0
      %s56 = sadd.s32 %s55, 1
      %s57 = scalar_select %p54, %s55, %s56
      %p60 = pneg %p54
      %p61 = scmp.eq.s32.totalorder %s24, 1
      %p62 = por %p60, %p61
      %p63 = scmp.ne.s32.totalorder %s55, %s58
      %p64 = scmp.eq.s32.totalorder %s24, 0
      %p65 = por %p63, %p64
      %p66 = scmp.ne.s32.totalorder %s55, %s58
      %p67 = scmp.eq.s32.totalorder %s29, 1
      %p68 = por %p66, %p67
      %p69 = scmp.ne.s32.totalorder %s58, %s59
      %p70 = scmp.eq.s32.totalorder %s29, 0
      %p71 = por %p69, %p70
      %p72 = scmp.ne.s32.totalorder %s58, %s59
      %p73 = scmp.eq.s32.totalorder %s30, 1
      %p74 = por %p72, %p73
      %p76 = scmp.ne.s32.totalorder %s59, %s75
      %p77 = scmp.eq.s32.totalorder %s30, 0
      %p78 = por %p76, %p77
      %s79 = ssub.s32 %s24, %s31
      %p80 = scmp.eq.s32.totalorder %s79, 0
      %s82 = sadd.s32 %s81, 1
      %s83 = scalar_select %p80, %s81, %s82
      %p86 = pneg %p80
      %p87 = scmp.eq.s32.totalorder %s24, 1
      %p88 = por %p86, %p87
      %p89 = scmp.ne.s32.totalorder %s81, %s84
      %p90 = scmp.eq.s32.totalorder %s24, 0
      %p91 = por %p89, %p90
      %p92 = scmp.ne.s32.totalorder %s81, %s84
      %p93 = scmp.eq.s32.totalorder %s29, 1
      %p94 = por %p92, %p93
      %p95 = scmp.ne.s32.totalorder %s84, %s85
      %p96 = scmp.eq.s32.totalorder %s29, 0
      %p97 = por %p95, %p96
      %p98 = scmp.ne.s32.totalorder %s84, %s85
      %p99 = scmp.eq.s32.totalorder %s30, 1
      %p100 = por %p98, %p99
      %p102 = scmp.ne.s32.totalorder %s85, %s101
      %p103 = scmp.eq.s32.totalorder %s30, 0
      %p104 = por %p102, %p103
      %s105 = ssub.s32 %s24, %s31
      %p106 = scmp.eq.s32.totalorder %s105, 0
      %s108 = sadd.s32 %s107, 1
      %s109 = scalar_select %p106, %s107, %s108
      %p112 = pneg %p106
      %p113 = scmp.eq.s32.totalorder %s24, 1
      %p114 = por %p112, %p113
      %p115 = scmp.ne.s32.totalorder %s107, %s110
      %p116 = scmp.eq.s32.totalorder %s24, 0
      %p117 = por %p115, %p116
      %p118 = scmp.ne.s32.totalorder %s107, %s110
      %p119 = scmp.eq.s32.totalorder %s29, 1
      %p120 = por %p118, %p119
      %p121 = scmp.ne.s32.totalorder %s110, %s111
      %p122 = scmp.eq.s32.totalorder %s29, 0
      %p123 = por %p121, %p122
      %p124 = scmp.ne.s32.totalorder %s110, %s111
      %p125 = scmp.eq.s32.totalorder %s30, 1
      %p126 = por %p124, %p125
      %p128 = scmp.ne.s32.totalorder %s111, %s127
      %p129 = scmp.eq.s32.totalorder %s30, 0
      %p130 = por %p128, %p129
      %s131 = ssub.s32 %s24, %s31
      %p132 = scmp.eq.s32.totalorder %s131, 0
      %s134 = sadd.s32 %s133, 1
      %s135 = scalar_select %p132, %s133, %s134
      %p138 = pneg %p132
      %p139 = scmp.eq.s32.totalorder %s24, 1
      %p140 = por %p138, %p139
      %p141 = scmp.ne.s32.totalorder %s133, %s136
      %p142 = scmp.eq.s32.totalorder %s24, 0
      %p143 = por %p141, %p142
      %p144 = scmp.ne.s32.totalorder %s133, %s136
      %p145 = scmp.eq.s32.totalorder %s29, 1
      %p146 = por %p144, %p145
      %p147 = scmp.ne.s32.totalorder %s136, %s137
      %p148 = scmp.eq.s32.totalorder %s29, 0
      %p149 = por %p147, %p148
      %p150 = scmp.ne.s32.totalorder %s136, %s137
      %p151 = scmp.eq.s32.totalorder %s30, 1
      %p152 = por %p150, %p151
      %p154 = scmp.ne.s32.totalorder %s137, %s153
      %p155 = scmp.eq.s32.totalorder %s30, 0
      %p156 = por %p154, %p155
      %s157 = ssub.s32 %s24, %s31
      %p158 = scmp.eq.s32.totalorder %s157, 0
      %s160 = sadd.s32 %s159, 1
      %s161 = scalar_select %p158, %s159, %s160
      %p164 = pneg %p158
      %p165 = scmp.eq.s32.totalorder %s24, 1
      %p166 = por %p164, %p165
      %p167 = scmp.ne.s32.totalorder %s159, %s162
      %p168 = scmp.eq.s32.totalorder %s24, 0
      %p169 = por %p167, %p168
      %p170 = scmp.ne.s32.totalorder %s159, %s162
      %p171 = scmp.eq.s32.totalorder %s29, 1
      %p172 = por %p170, %p171
      %p173 = scmp.ne.s32.totalorder %s162, %s163
      %p174 = scmp.eq.s32.totalorder %s29, 0
      %p175 = por %p173, %p174
      %p176 = scmp.ne.s32.totalorder %s162, %s163
      %p177 = scmp.eq.s32.totalorder %s30, 1
      %p178 = por %p176, %p177
      %p180 = scmp.ne.s32.totalorder %s163, %s179
      %p181 = scmp.eq.s32.totalorder %s30, 0
      %p182 = por %p180, %p181
      %s183 = ssub.s32 %s24, %s31
      %p184 = scmp.eq.s32.totalorder %s183, 0
      %s186 = sadd.s32 %s185, 1
      %s187 = scalar_select %p184, %s185, %s186
      %p190 = pneg %p184
      %p191 = scmp.eq.s32.totalorder %s24, 1
      %p192 = por %p190, %p191
      %p193 = scmp.ne.s32.totalorder %s185, %s188
      %p194 = scmp.eq.s32.totalorder %s24, 0
      %p195 = por %p193, %p194
      %p196 = scmp.ne.s32.totalorder %s185, %s188
      %p197 = scmp.eq.s32.totalorder %s29, 1
      %p198 = por %p196, %p197
      %p199 = scmp.ne.s32.totalorder %s188, %s189
      %p200 = scmp.eq.s32.totalorder %s29, 0
      %p201 = por %p199, %p200
      %p202 = scmp.ne.s32.totalorder %s188, %s189
      %p203 = scmp.eq.s32.totalorder %s30, 1
      %p204 = por %p202, %p203
      %p206 = scmp.ne.s32.totalorder %s189, %s205
      %p207 = scmp.eq.s32.totalorder %s30, 0
      %p208 = por %p206, %p207
      %s209 = ssub.s32 %s24, %s31
      %p210 = scmp.eq.s32.totalorder %s209, 0
      %s212 = sadd.s32 %s211, 1
      %s213 = scalar_select %p210, %s211, %s212
      %p216 = pneg %p210
      %p217 = scmp.eq.s32.totalorder %s24, 1
      %p218 = por %p216, %p217
      %p219 = scmp.ne.s32.totalorder %s211, %s214
      %p220 = scmp.eq.s32.totalorder %s24, 0
      %p221 = por %p219, %p220
      %p222 = scmp.ne.s32.totalorder %s211, %s214
      %p223 = scmp.eq.s32.totalorder %s29, 1
      %p224 = por %p222, %p223
      %p225 = scmp.ne.s32.totalorder %s214, %s215
      %p226 = scmp.eq.s32.totalorder %s29, 0
      %p227 = por %p225, %p226
      %p228 = scmp.ne.s32.totalorder %s214, %s215
      %p229 = scmp.eq.s32.totalorder %s30, 1
      %p230 = por %p228, %p229
      %p232 = scmp.ne.s32.totalorder %s215, %s231
      %p233 = scmp.eq.s32.totalorder %s30, 0
      %p234 = por %p232, %p233
      %s235 = ssub.s32 %s24, %s31
      %p236 = scmp.eq.s32.totalorder %s235, 0
      %s238 = sadd.s32 %s237, 1
      %s239 = scalar_select %p236, %s237, %s238
      %p242 = pneg %p236
      %p243 = scmp.eq.s32.totalorder %s24, 1
      %p244 = por %p242, %p243
      %p245 = scmp.ne.s32.totalorder %s237, %s240
      %p246 = scmp.eq.s32.totalorder %s24, 0
      %p247 = por %p245, %p246
      %p248 = scmp.ne.s32.totalorder %s237, %s240
      %p249 = scmp.eq.s32.totalorder %s29, 1
      %p250 = por %p248, %p249
      %p251 = scmp.ne.s32.totalorder %s240, %s241
      %p252 = scmp.eq.s32.totalorder %s29, 0
      %p253 = por %p251, %p252
      %p254 = scmp.ne.s32.totalorder %s240, %s241
      %p255 = scmp.eq.s32.totalorder %s30, 1
      %p256 = por %p254, %p255
      %p258 = scmp.ne.s32.totalorder %s241, %s257
      %p259 = scmp.eq.s32.totalorder %s30, 0
      %p260 = por %p258, %p259
      %s261 = ssub.s32 %s24, %s31
      %p262 = scmp.eq.s32.totalorder %s261, 0
      %s264 = sadd.s32 %s263, 1
      %s265 = scalar_select %p262, %s263, %s264
      %p268 = pneg %p262
      %p269 = scmp.eq.s32.totalorder %s24, 1
      %p270 = por %p268, %p269
      %p271 = scmp.ne.s32.totalorder %s263, %s266
      %p272 = scmp.eq.s32.totalorder %s24, 0
      %p273 = por %p271, %p272
      %p274 = scmp.ne.s32.totalorder %s263, %s266
      %p275 = scmp.eq.s32.totalorder %s29, 1
      %p276 = por %p274, %p275
      %p277 = scmp.ne.s32.totalorder %s266, %s267
      %p278 = scmp.eq.s32.totalorder %s29, 0
      %p279 = por %p277, %p278
      %p280 = scmp.ne.s32.totalorder %s266, %s267
      %p281 = scmp.eq.s32.totalorder %s30, 1
      %p282 = por %p280, %p281
      %p284 = scmp.ne.s32.totalorder %s267, %s283
      %p285 = scmp.eq.s32.totalorder %s30, 0
      %p286 = por %p284, %p285
      %s287 = ssub.s32 %s24, %s31
      %p288 = scmp.eq.s32.totalorder %s287, 0
      %s290 = sadd.s32 %s289, 1
      %s291 = scalar_select %p288, %s289, %s290
      %p294 = pneg %p288
      %p295 = scmp.eq.s32.totalorder %s24, 1
      %p296 = por %p294, %p295
      %p297 = scmp.ne.s32.totalorder %s289, %s292
      %p298 = scmp.eq.s32.totalorder %s24, 0
      %p299 = por %p297, %p298
      %p300 = scmp.ne.s32.totalorder %s289, %s292
      %p301 = scmp.eq.s32.totalorder %s29, 1
      %p302 = por %p300, %p301
      %p303 = scmp.ne.s32.totalorder %s292, %s293
      %p304 = scmp.eq.s32.totalorder %s29, 0
      %p305 = por %p303, %p304
      %p306 = scmp.ne.s32.totalorder %s292, %s293
      %p307 = scmp.eq.s32.totalorder %s30, 1
      %p308 = por %p306, %p307
      %p310 = scmp.ne.s32.totalorder %s293, %s309
      %p311 = scmp.eq.s32.totalorder %s30, 0
      %p312 = por %p310, %p311
      %s313 = ssub.s32 %s24, %s31
      %p314 = scmp.eq.s32.totalorder %s313, 0
      %s316 = sadd.s32 %s315, 1
      %s317 = scalar_select %p314, %s315, %s316
      %p320 = pneg %p314
      %p321 = scmp.eq.s32.totalorder %s24, 1
      %p322 = por %p320, %p321
      %p323 = scmp.ne.s32.totalorder %s315, %s318
      %p324 = scmp.eq.s32.totalorder %s24, 0
      %p325 = por %p323, %p324
      %p326 = scmp.ne.s32.totalorder %s315, %s318
      %p327 = scmp.eq.s32.totalorder %s29, 1
      %p328 = por %p326, %p327
      %p329 = scmp.ne.s32.totalorder %s318, %s319
      %p330 = scmp.eq.s32.totalorder %s29, 0
      %p331 = por %p329, %p330
      %p332 = scmp.ne.s32.totalorder %s318, %s319
      %p333 = scmp.eq.s32.totalorder %s30, 1
      %p334 = por %p332, %p333
      %p336 = scmp.ne.s32.totalorder %s319, %s335
      %p337 = scmp.eq.s32.totalorder %s30, 0
      %p338 = por %p336, %p337
      %s339 = ssub.s32 %s24, %s31
      %p340 = scmp.eq.s32.totalorder %s339, 0
      %s342 = sadd.s32 %s341, 1
      %s343 = scalar_select %p340, %s341, %s342
      %p346 = pneg %p340
      %p347 = scmp.eq.s32.totalorder %s24, 1
      %p348 = por %p346, %p347
      %p349 = scmp.ne.s32.totalorder %s341, %s344
      %p350 = scmp.eq.s32.totalorder %s24, 0
      %p351 = por %p349, %p350
      %p352 = scmp.ne.s32.totalorder %s341, %s344
      %p353 = scmp.eq.s32.totalorder %s29, 1
      %p354 = por %p352, %p353
      %p355 = scmp.ne.s32.totalorder %s344, %s345
      %p356 = scmp.eq.s32.totalorder %s29, 0
      %p357 = por %p355, %p356
      %p358 = scmp.ne.s32.totalorder %s344, %s345
      %p359 = scmp.eq.s32.totalorder %s30, 1
      %p360 = por %p358, %p359
      %p362 = scmp.ne.s32.totalorder %s345, %s361
      %p363 = scmp.eq.s32.totalorder %s30, 0
      %p364 = por %p362, %p363
      %s365 = ssub.s32 %s24, %s31
      %p366 = scmp.eq.s32.totalorder %s365, 0
      %s368 = sadd.s32 %s367, 1
      %s369 = scalar_select %p366, %s367, %s368
      %p372 = pneg %p366
      %p373 = scmp.eq.s32.totalorder %s24, 1
      %p374 = por %p372, %p373
      %p375 = scmp.ne.s32.totalorder %s367, %s370
      %p376 = scmp.eq.s32.totalorder %s24, 0
      %p377 = por %p375, %p376
      %p378 = scmp.ne.s32.totalorder %s367, %s370
      %p379 = scmp.eq.s32.totalorder %s29, 1
      %p380 = por %p378, %p379
      %p381 = scmp.ne.s32.totalorder %s370, %s371
      %p382 = scmp.eq.s32.totalorder %s29, 0
      %p383 = por %p381, %p382
      %p384 = scmp.ne.s32.totalorder %s370, %s371
      %p385 = scmp.eq.s32.totalorder %s30, 1
      %p386 = por %p384, %p385
      %p388 = scmp.ne.s32.totalorder %s371, %s387
      %p389 = scmp.eq.s32.totalorder %s30, 0
      %p390 = por %p388, %p389
      %s391 = ssub.s32 %s24, %s31
      %p392 = scmp.eq.s32.totalorder %s391, 0
      %s394 = sadd.s32 %s393, 1
      %s395 = scalar_select %p392, %s393, %s394
      %p398 = pneg %p392
      %p399 = scmp.eq.s32.totalorder %s24, 1
      %p400 = por %p398, %p399
      %p401 = scmp.ne.s32.totalorder %s393, %s396
      %p402 = scmp.eq.s32.totalorder %s24, 0
      %p403 = por %p401, %p402
      %p404 = scmp.ne.s32.totalorder %s393, %s396
      %p405 = scmp.eq.s32.totalorder %s29, 1
      %p406 = por %p404, %p405
      %p407 = scmp.ne.s32.totalorder %s396, %s397
      %p408 = scmp.eq.s32.totalorder %s29, 0
      %p409 = por %p407, %p408
      %p410 = scmp.ne.s32.totalorder %s396, %s397
      %p411 = scmp.eq.s32.totalorder %s30, 1
      %p412 = por %p410, %p411
      %p414 = scmp.ne.s32.totalorder %s397, %s413
      %p415 = scmp.eq.s32.totalorder %s30, 0
      %p416 = por %p414, %p415
      %s417 = ssub.s32 %s24, %s31
      %p418 = scmp.eq.s32.totalorder %s417, 0
      %s420 = sadd.s32 %s419, 1
      %s421 = scalar_select %p418, %s419, %s420
      %p424 = pneg %p418
      %p425 = scmp.eq.s32.totalorder %s24, 1
      %p426 = por %p424, %p425
      %p427 = scmp.ne.s32.totalorder %s419, %s422
      %p428 = scmp.eq.s32.totalorder %s24, 0
      %p429 = por %p427, %p428
      %p430 = scmp.ne.s32.totalorder %s419, %s422
      %p431 = scmp.eq.s32.totalorder %s29, 1
      %p432 = por %p430, %p431
      %p433 = scmp.ne.s32.totalorder %s422, %s423
      %p434 = scmp.eq.s32.totalorder %s29, 0
      %p435 = por %p433, %p434
      %p436 = scmp.ne.s32.totalorder %s422, %s423
      %p437 = scmp.eq.s32.totalorder %s30, 1
      %p438 = por %p436, %p437
      %p440 = scmp.ne.s32.totalorder %s423, %s439
      %p441 = scmp.eq.s32.totalorder %s30, 0
      %p442 = por %p440, %p441
      %s443 = ssub.s32 %s24, %s31
      %p444 = scmp.eq.s32.totalorder %s443, 0
      %s446 = sadd.s32 %s445, 1
      %s447 = scalar_select %p444, %s445, %s446
      %p450 = pneg %p444
      %p451 = scmp.eq.s32.totalorder %s24, 1
      %p452 = por %p450, %p451
      %p453 = scmp.ne.s32.totalorder %s445, %s448
      %p454 = scmp.eq.s32.totalorder %s24, 0
      %p455 = por %p453, %p454
      %p456 = scmp.ne.s32.totalorder %s445, %s448
      %p457 = scmp.eq.s32.totalorder %s29, 1
      %p458 = por %p456, %p457
      %p459 = scmp.ne.s32.totalorder %s448, %s449
      %p460 = scmp.eq.s32.totalorder %s29, 0
      %p461 = por %p459, %p460
      %p462 = scmp.ne.s32.totalorder %s448, %s449
      %p463 = scmp.eq.s32.totalorder %s30, 1
      %p464 = por %p462, %p463
      %p466 = scmp.ne.s32.totalorder %s449, %s465
      %p467 = scmp.eq.s32.totalorder %s30, 0
      %p468 = por %p466, %p467
      %s470 = sadd.s32 %s469, 1
      %p473 = scmp.eq.s32.totalorder %s24, 1
      %p474 = scmp.ne.s32.totalorder %s469, %s471
      %p475 = scmp.eq.s32.totalorder %s24, 0
      %p476 = por %p474, %p475
      %p477 = scmp.ne.s32.totalorder %s469, %s471
      %p478 = scmp.eq.s32.totalorder %s29, 1
      %p479 = por %p477, %p478
      %p480 = scmp.ne.s32.totalorder %s471, %s472
      %p481 = scmp.eq.s32.totalorder %s29, 0
      %p482 = por %p480, %p481
      %p483 = scmp.ne.s32.totalorder %s471, %s472
      %p484 = scmp.eq.s32.totalorder %s30, 1
      %p485 = por %p483, %p484
      %p487 = scmp.ne.s32.totalorder %s472, %s486
      %p488 = scmp.eq.s32.totalorder %s30, 0
      %p489 = por %p487, %p488
      %p490 = scmp.le.s32.totalorder 1, %s24
      %p491 = scmp.lt.s32.totalorder %s24, 3
      %p492 = pnand %p490, %p491
      %p493 = pneg %p492
      // Predicated region
      $region9: #{tpu_custom_call.1} parent=5 // pred_check
        _
      $region10: #{tpu_custom_call.1} parent=5 // pred_check_branch
        %495 = sbr.rel (%p492) target = $region12
      $region11: #{tpu_custom_call.1} parent=5 // pred_region
        %s496 = ssub.s32 %s24, 1
        // Predicated region
        $region13: #{tpu_custom_call.1} parent=11 // pred_check
          %p497 = pneg %p45
        $region14: #{tpu_custom_call.1} parent=11 // pred_check_branch
          %499 = sbr.rel (%p497) target = $region16
        $region15: #{tpu_custom_call.1} parent=11 // pred_region
          _
        $region16: #{tpu_custom_call.1} parent=11 // pred_fallthru
          _
      $region12: #{tpu_custom_call.1} parent=5 // pred_fallthru
        _
      %p500 = scmp.lt.s32.totalorder %s24, 2
      // Predicated region
      $region17: #{tpu_custom_call.1} parent=5 // pred_check
        %p501 = pneg %p500
      $region18: #{tpu_custom_call.1} parent=5 // pred_check_branch
        %503 = sbr.rel (%p501) target = $region20
      $region19: #{tpu_custom_call.1} parent=5 // pred_region
        // Predicated region
        $region21: #{tpu_custom_call.1} parent=19 // pred_check
          %p504 = pneg %p65
        $region22: #{tpu_custom_call.1} parent=19 // pred_check_branch
          %506 = sbr.rel (%p504) target = $region24
        $region23: #{tpu_custom_call.1} parent=19 // pred_region
          %p507 = scmp.lt.s32.totalorder %s24, 1
          %s508 = scalar_select %p507, %s24, 1
          %s509 = smul.addr %s508, 16
          %s510 = smul.addr %s509, 4
          %s511 = scalar_lea.vmem %s1, %s510
        $region24: #{tpu_custom_call.1} parent=19 // pred_fallthru
          _
        // Predicated region
        $region25: #{tpu_custom_call.1} parent=19 // pred_check
          %p512 = pneg %p91
        $region26: #{tpu_custom_call.1} parent=19 // pred_check_branch
          %514 = sbr.rel (%p512) target = $region28
        $region27: #{tpu_custom_call.1} parent=19 // pred_region
          %p515 = scmp.lt.s32.totalorder %s24, 1
          %s516 = scalar_select %p515, %s24, 1
          %s517 = scalar_lea.vmem %s2, %s516
        $region28: #{tpu_custom_call.1} parent=19 // pred_fallthru
          _
        // Predicated region
        $region29: #{tpu_custom_call.1} parent=19 // pred_check
          %p518 = pneg %p117
        $region30: #{tpu_custom_call.1} parent=19 // pred_check_branch
          %520 = sbr.rel (%p518) target = $region32
        $region31: #{tpu_custom_call.1} parent=19 // pred_region
          %p521 = scmp.lt.s32.totalorder %s24, 1
          %s522 = scalar_select %p521, %s24, 1
          %s523 = smul.addr %s522, 16
          %s524 = smul.addr %s523, 4
          %s525 = scalar_lea.vmem %s3, %s524
        $region32: #{tpu_custom_call.1} parent=19 // pred_fallthru
          _
        // Predicated region
        $region33: #{tpu_custom_call.1} parent=19 // pred_check
          %p526 = pneg %p143
        $region34: #{tpu_custom_call.1} parent=19 // pred_check_branch
          %528 = sbr.rel (%p526) target = $region36
        $region35: #{tpu_custom_call.1} parent=19 // pred_region
          %p529 = scmp.lt.s32.totalorder %s24, 1
          %s530 = scalar_select %p529, %s24, 1
          %s531 = scalar_lea.vmem %s4, %s530
        $region36: #{tpu_custom_call.1} parent=19 // pred_fallthru
          _
        // Predicated region
        $region37: #{tpu_custom_call.1} parent=19 // pred_check
          %p532 = pneg %p169
        $region38: #{tpu_custom_call.1} parent=19 // pred_check_branch
          %534 = sbr.rel (%p532) target = $region40
        $region39: #{tpu_custom_call.1} parent=19 // pred_region
          %p535 = scmp.lt.s32.totalorder %s24, 1
          %s536 = scalar_select %p535, %s24, 1
          %s537 = smul.addr %s536, 16
          %s538 = smul.addr %s537, 4
          %s539 = scalar_lea.vmem %s5, %s538
        $region40: #{tpu_custom_call.1} parent=19 // pred_fallthru
          _
        // Predicated region
        $region41: #{tpu_custom_call.1} parent=19 // pred_check
          %p540 = pneg %p195
        $region42: #{tpu_custom_call.1} parent=19 // pred_check_branch
          %542 = sbr.rel (%p540) target = $region44
        $region43: #{tpu_custom_call.1} parent=19 // pred_region
          %p543 = scmp.lt.s32.totalorder %s24, 1
          %s544 = scalar_select %p543, %s24, 1
          %s545 = scalar_lea.vmem %s6, %s544
        $region44: #{tpu_custom_call.1} parent=19 // pred_fallthru
          _
        // Predicated region
        $region45: #{tpu_custom_call.1} parent=19 // pred_check
          %p546 = pneg %p221
        $region46: #{tpu_custom_call.1} parent=19 // pred_check_branch
          %548 = sbr.rel (%p546) target = $region48
        $region47: #{tpu_custom_call.1} parent=19 // pred_region
          %p549 = scmp.lt.s32.totalorder %s24, 1
          %s550 = scalar_select %p549, %s24, 1
          %s551 = smul.addr %s550, 4
          %s552 = smul.addr %s551, 4
          %s553 = scalar_lea.vmem %s7, %s552
        $region48: #{tpu_custom_call.1} parent=19 // pred_fallthru
          _
        // Predicated region
        $region49: #{tpu_custom_call.1} parent=19 // pred_check
          %p554 = pneg %p247
        $region50: #{tpu_custom_call.1} parent=19 // pred_check_branch
          %556 = sbr.rel (%p554) target = $region52
        $region51: #{tpu_custom_call.1} parent=19 // pred_region
          %p557 = scmp.lt.s32.totalorder %s24, 1
          %s558 = scalar_select %p557, %s24, 1
          %s559 = scalar_lea.vmem %s8, %s558
        $region52: #{tpu_custom_call.1} parent=19 // pred_fallthru
          _
        // Predicated region
        $region53: #{tpu_custom_call.1} parent=19 // pred_check
          %p560 = pneg %p273
        $region54: #{tpu_custom_call.1} parent=19 // pred_check_branch
          %562 = sbr.rel (%p560) target = $region56
        $region55: #{tpu_custom_call.1} parent=19 // pred_region
          %p563 = scmp.lt.s32.totalorder %s24, 1
          %s564 = scalar_select %p563, %s24, 1
          %s565 = scalar_lea.vmem %s9, %s564
        $region56: #{tpu_custom_call.1} parent=19 // pred_fallthru
          _
        // Predicated region
        $region57: #{tpu_custom_call.1} parent=19 // pred_check
          %p566 = pneg %p299
        $region58: #{tpu_custom_call.1} parent=19 // pred_check_branch
          %568 = sbr.rel (%p566) target = $region60
        $region59: #{tpu_custom_call.1} parent=19 // pred_region
          %p569 = scmp.lt.s32.totalorder %s24, 1
          %s570 = scalar_select %p569, %s24, 1
          %s571 = scalar_lea.vmem %s10, %s570
        $region60: #{tpu_custom_call.1} parent=19 // pred_fallthru
          _
        // Predicated region
        $region61: #{tpu_custom_call.1} parent=19 // pred_check
          %p572 = pneg %p325
        $region62: #{tpu_custom_call.1} parent=19 // pred_check_branch
          %574 = sbr.rel (%p572) target = $region64
        $region63: #{tpu_custom_call.1} parent=19 // pred_region
          %p575 = scmp.lt.s32.totalorder %s24, 1
          %s576 = scalar_select %p575, %s24, 1
          %s577 = smul.addr %s576, 16
          %s578 = smul.addr %s577, 4
          %s579 = scalar_lea.vmem %s11, %s578
        $region64: #{tpu_custom_call.1} parent=19 // pred_fallthru
          _
        // Predicated region
        $region65: #{tpu_custom_call.1} parent=19 // pred_check
          %p580 = pneg %p351
        $region66: #{tpu_custom_call.1} parent=19 // pred_check_branch
          %582 = sbr.rel (%p580) target = $region68
        $region67: #{tpu_custom_call.1} parent=19 // pred_region
          %p583 = scmp.lt.s32.totalorder %s24, 1
          %s584 = scalar_select %p583, %s24, 1
          %s585 = scalar_lea.vmem %s12, %s584
        $region68: #{tpu_custom_call.1} parent=19 // pred_fallthru
          _
        // Predicated region
        $region69: #{tpu_custom_call.1} parent=19 // pred_check
          %p586 = pneg %p377
        $region70: #{tpu_custom_call.1} parent=19 // pred_check_branch
          %588 = sbr.rel (%p586) target = $region72
        $region71: #{tpu_custom_call.1} parent=19 // pred_region
          %p589 = scmp.lt.s32.totalorder %s24, 1
          %s590 = scalar_select %p589, %s24, 1
          %s591 = smul.addr %s590, 16
          %s592 = smul.addr %s591, 4
          %s593 = scalar_lea.vmem %s13, %s592
        $region72: #{tpu_custom_call.1} parent=19 // pred_fallthru
          _
        // Predicated region
        $region73: #{tpu_custom_call.1} parent=19 // pred_check
          %p594 = pneg %p403
        $region74: #{tpu_custom_call.1} parent=19 // pred_check_branch
          %596 = sbr.rel (%p594) target = $region76
        $region75: #{tpu_custom_call.1} parent=19 // pred_region
          %p597 = scmp.lt.s32.totalorder %s24, 1
          %s598 = scalar_select %p597, %s24, 1
          %s599 = scalar_lea.vmem %s14, %s598
        $region76: #{tpu_custom_call.1} parent=19 // pred_fallthru
          _
        // Predicated region
        $region77: #{tpu_custom_call.1} parent=19 // pred_check
          %p600 = pneg %p429
        $region78: #{tpu_custom_call.1} parent=19 // pred_check_branch
          %602 = sbr.rel (%p600) target = $region80
        $region79: #{tpu_custom_call.1} parent=19 // pred_region
          %p603 = scmp.lt.s32.totalorder %s24, 1
          %s604 = scalar_select %p603, %s24, 1
          %s605 = scalar_lea.vmem %s15, %s604
        $region80: #{tpu_custom_call.1} parent=19 // pred_fallthru
          _
        // Predicated region
        $region81: #{tpu_custom_call.1} parent=19 // pred_check
          %p606 = pneg %p455
        $region82: #{tpu_custom_call.1} parent=19 // pred_check_branch
          %608 = sbr.rel (%p606) target = $region84
        $region83: #{tpu_custom_call.1} parent=19 // pred_region
          %p609 = scmp.lt.s32.totalorder %s24, 1
          %s610 = scalar_select %p609, %s24, 1
          %s611 = scalar_lea.vmem %s16, %s610
        $region84: #{tpu_custom_call.1} parent=19 // pred_fallthru
          _
      $region20: #{tpu_custom_call.1} parent=5 // pred_fallthru
        _
      %p612 = scmp.le.s32.totalorder 1, %s24
      %p613 = scmp.lt.s32.totalorder %s24, 3
      %p614 = pnand %p612, %p613
      %p615 = pneg %p614
      // Predicated region
      $region85: #{tpu_custom_call.1} parent=5 // pred_check
        _
      $region86: #{tpu_custom_call.1} parent=5 // pred_check_branch
        %617 = sbr.rel (%p614) target = $region88
      $region87: #{tpu_custom_call.1} parent=5 // pred_region
        %s618 = ssub.s32 %s24, 1
        %p619 = pneg %p45
        %p620 = pneg %p42
        %p621 = scmp.lt.s32.totalorder %s29, 1
        %s622 = scalar_select %p621, %s29, 1
        %s623 = smul.addr %s622, 16
        %s624 = smul.addr %s623, 4
        %s625 = scalar_lea.vmem %s1, %s624
        %p626 = pneg %p71
        %p627 = pneg %p68
        %p628 = scmp.lt.s32.totalorder %s29, 1
        %s629 = scalar_select %p628, %s29, 1
        %s630 = scalar_lea.vmem %s2, %s629
        %p631 = pneg %p97
        %p632 = pneg %p94
        %p633 = scmp.lt.s32.totalorder %s29, 1
        %s634 = scalar_select %p633, %s29, 1
        %s635 = smul.addr %s634, 16
        %s636 = smul.addr %s635, 4
        %s637 = scalar_lea.vmem %s3, %s636
        %p638 = pneg %p123
        %p639 = pneg %p120
        %p640 = scmp.lt.s32.totalorder %s29, 1
        %s641 = scalar_select %p640, %s29, 1
        %s642 = scalar_lea.vmem %s4, %s641
        %p643 = pneg %p149
        %p644 = pneg %p146
        %p645 = scmp.lt.s32.totalorder %s29, 1
        %s646 = scalar_select %p645, %s29, 1
        %s647 = smul.addr %s646, 16
        %s648 = smul.addr %s647, 4
        %s649 = scalar_lea.vmem %s5, %s648
        %p650 = pneg %p175
        %p651 = pneg %p172
        %p652 = scmp.lt.s32.totalorder %s29, 1
        %s653 = scalar_select %p652, %s29, 1
        %s654 = scalar_lea.vmem %s6, %s653
        %p655 = pneg %p201
        %p656 = pneg %p198
        %p657 = scmp.lt.s32.totalorder %s29, 1
        %s658 = scalar_select %p657, %s29, 1
        %s659 = smul.addr %s658, 4
        %s660 = smul.addr %s659, 4
        %s661 = scalar_lea.vmem %s7, %s660
        %p662 = pneg %p227
        %p663 = pneg %p224
        %p664 = scmp.lt.s32.totalorder %s29, 1
        %s665 = scalar_select %p664, %s29, 1
        %s666 = scalar_lea.vmem %s8, %s665
        %p667 = pneg %p253
        %p668 = pneg %p250
        %p669 = scmp.lt.s32.totalorder %s29, 1
        %s670 = scalar_select %p669, %s29, 1
        %s671 = scalar_lea.vmem %s9, %s670
        %p672 = pneg %p279
        %p673 = pneg %p276
        %p674 = scmp.lt.s32.totalorder %s29, 1
        %s675 = scalar_select %p674, %s29, 1
        %s676 = scalar_lea.vmem %s10, %s675
        %p677 = pneg %p305
        %p678 = pneg %p302
        %p679 = scmp.lt.s32.totalorder %s29, 1
        %s680 = scalar_select %p679, %s29, 1
        %s681 = smul.addr %s680, 16
        %s682 = smul.addr %s681, 4
        %s683 = scalar_lea.vmem %s11, %s682
        %p684 = pneg %p331
        %p685 = pneg %p328
        %p686 = scmp.lt.s32.totalorder %s29, 1
        %s687 = scalar_select %p686, %s29, 1
        %s688 = scalar_lea.vmem %s12, %s687
        %p689 = pneg %p357
        %p690 = pneg %p354
        %p691 = scmp.lt.s32.totalorder %s29, 1
        %s692 = scalar_select %p691, %s29, 1
        %s693 = smul.addr %s692, 16
        %s694 = smul.addr %s693, 4
        %s695 = scalar_lea.vmem %s13, %s694
        %p696 = pneg %p383
        %p697 = pneg %p380
        %p698 = scmp.lt.s32.totalorder %s29, 1
        %s699 = scalar_select %p698, %s29, 1
        %s700 = scalar_lea.vmem %s14, %s699
        %p701 = pneg %p409
        %p702 = pneg %p406
        %p703 = scmp.lt.s32.totalorder %s29, 1
        %s704 = scalar_select %p703, %s29, 1
        %s705 = scalar_lea.vmem %s15, %s704
        %p706 = pneg %p435
        %p707 = pneg %p432
        %p708 = scmp.lt.s32.totalorder %s29, 1
        %s709 = scalar_select %p708, %s29, 1
        %s710 = scalar_lea.vmem %s16, %s709
        %p711 = pneg %p461
        %p712 = pneg %p458
        %p713 = pneg %p482
        %p714 = pneg %p479
        %p715 = scmp.lt.s32.totalorder %s29, 1
        %s716 = scalar_select %p715, %s29, 1
        %s717 = smul.addr %s716, 16
        %s718 = smul.addr %s717, 4
        %s719 = scalar_lea.vmem %s1, %s718
        %p720 = scmp.lt.s32.totalorder %s29, 1
        %s721 = scalar_select %p720, %s29, 1
        %s722 = scalar_lea.vmem %s2, %s721
        %p723 = scmp.lt.s32.totalorder %s29, 1
        %s724 = scalar_select %p723, %s29, 1
        %s725 = smul.addr %s724, 16
        %s726 = smul.addr %s725, 4
        %s727 = scalar_lea.vmem %s3, %s726
        %p728 = scmp.lt.s32.totalorder %s29, 1
        %s729 = scalar_select %p728, %s29, 1
        %s730 = scalar_lea.vmem %s4, %s729
        %p731 = scmp.lt.s32.totalorder %s29, 1
        %s732 = scalar_select %p731, %s29, 1
        %s733 = smul.addr %s732, 16
        %s734 = smul.addr %s733, 4
        %s735 = scalar_lea.vmem %s5, %s734
        %p736 = scmp.lt.s32.totalorder %s29, 1
        %s737 = scalar_select %p736, %s29, 1
        %s738 = scalar_lea.vmem %s6, %s737
        %p739 = scmp.lt.s32.totalorder %s29, 1
        %s740 = scalar_select %p739, %s29, 1
        %s741 = smul.addr %s740, 4
        %s742 = smul.addr %s741, 4
        %s743 = scalar_lea.vmem %s7, %s742
        %p744 = scmp.lt.s32.totalorder %s29, 1
        %s745 = scalar_select %p744, %s29, 1
        %s746 = scalar_lea.vmem %s8, %s745
        %p747 = scmp.lt.s32.totalorder %s29, 1
        %s748 = scalar_select %p747, %s29, 1
        %s749 = scalar_lea.vmem %s9, %s748
        %p750 = scmp.lt.s32.totalorder %s29, 1
        %s751 = scalar_select %p750, %s29, 1
        %s752 = scalar_lea.vmem %s10, %s751
        %p753 = scmp.lt.s32.totalorder %s29, 1
        %s754 = scalar_select %p753, %s29, 1
        %s755 = smul.addr %s754, 16
        %s756 = smul.addr %s755, 4
        %s757 = scalar_lea.vmem %s11, %s756
        %p758 = scmp.lt.s32.totalorder %s29, 1
        %s759 = scalar_select %p758, %s29, 1
        %s760 = scalar_lea.vmem %s12, %s759
        %p761 = scmp.lt.s32.totalorder %s29, 1
        %s762 = scalar_select %p761, %s29, 1
        %s763 = smul.addr %s762, 16
        %s764 = smul.addr %s763, 4
        %s765 = scalar_lea.vmem %s13, %s764
        %p766 = scmp.lt.s32.totalorder %s29, 1
        %s767 = scalar_select %p766, %s29, 1
        %s768 = scalar_lea.vmem %s14, %s767
        %p769 = scmp.lt.s32.totalorder %s29, 1
        %s770 = scalar_select %p769, %s29, 1
        %s771 = scalar_lea.vmem %s15, %s770
        %p772 = scmp.lt.s32.totalorder %s29, 1
        %s773 = scalar_select %p772, %s29, 1
        %s774 = scalar_lea.vmem %s16, %s773
        %p776 = scmp.eq.s32.totalorder %s29, 0
        // Predicated region
        $region89: #{tpu_custom_call.1} parent=87 // pred_check
          %p777 = pneg %p776
        $region90: #{tpu_custom_call.1} parent=87 // pred_check_branch
          %779 = sbr.rel (%p777) target = $region92
        $region91: #{tpu_custom_call.1} parent=87 // pred_region
          %v780 = vld [vmem:[%s0] sm:$0xff]
          %v781 = vld [vmem:[%s0 + $0x8] sm:$0xff]
          %782 = vst [vmem:[#allocation2] sm:$0xff] %v780
          %783 = vst [vmem:[#allocation2 + $0x8] sm:$0xff] %v781
        $region92: #{tpu_custom_call.1} parent=87 // pred_fallthru
          _
        %v784 = vld [vmem:[#allocation2] sm:$0xff]
        %v785 = vld [vmem:[#allocation2 + $0x8] sm:$0xff]
        %v786 = vld [vmem:[%s719] sm:$0xf]
        %v787 = vld [vmem:[%s719 + $0x4] sm:$0xf]
        %v788 = vld [vmem:[%s719 + $0x8] sm:$0xf]
        %v789 = vld [vmem:[%s719 + $0xc] sm:$0xf]
        %v790 = vld [vmem:[%s719 + $0x10] sm:$0xf]
        %v791 = vld [vmem:[%s719 + $0x14] sm:$0xf]
        %v792 = vld [vmem:[%s719 + $0x18] sm:$0xf]
        %v793 = vld [vmem:[%s719 + $0x1c] sm:$0xf]
        %v794 = vld [vmem:[%s719 + $0x20] sm:$0xf]
        %v795 = vld [vmem:[%s719 + $0x24] sm:$0xf]
        %v796 = vld [vmem:[%s719 + $0x28] sm:$0xf]
        %v797 = vld [vmem:[%s719 + $0x2c] sm:$0xf]
        %v798 = vld [vmem:[%s719 + $0x30] sm:$0xf]
        %v799 = vld [vmem:[%s719 + $0x34] sm:$0xf]
        %v800 = vld [vmem:[%s719 + $0x38] sm:$0xf]
        %v801 = vld [vmem:[%s719 + $0x3c] sm:$0xf]
        %v802 = vld [vmem:[%s722] sm:$0x1]
        %v803 = vpack.c.bf16 %v785, %v784
        %v805 = vlaneseq
        %v806 = vshrl.u32 %v805, 7
        %v807 = vsub.s32 0, %v806
        %v808 = vrot.slane %v802, %v807
        %v826 = vunpack.c.l.b16 %v786
        %v827 = vunpack.c.l.b16 %v787
        %v828 = vunpack.c.l.b16 %v788
        %v829 = vunpack.c.l.b16 %v789
        %v830 = vunpack.c.l.b16 %v790
        %v831 = vunpack.c.l.b16 %v791
        %v832 = vunpack.c.l.b16 %v792
        %v833 = vunpack.c.l.b16 %v793
        %v834 = vunpack.c.l.b16 %v794
        %v835 = vunpack.c.l.b16 %v795
        %v836 = vunpack.c.l.b16 %v796
        %v837 = vunpack.c.l.b16 %v797
        %v838 = vunpack.c.l.b16 %v798
        %v839 = vunpack.c.l.b16 %v799
        %v840 = vunpack.c.l.b16 %v800
        %v841 = vunpack.c.l.b16 %v801
        %v842 = vpack.c.b16 %v827, %v826
        %v843 = vpack.c.b16 %v829, %v828
        %v844 = vpack.c.b16 %v831, %v830
        %v845 = vpack.c.b16 %v833, %v832
        %v846 = vpack.c.b16 %v835, %v834
        %v847 = vpack.c.b16 %v837, %v836
        %v848 = vpack.c.b16 %v839, %v838
        %v849 = vpack.c.b16 %v841, %v840
        %858 = vmatprep.subr.bf16.mxu0 0
        %859 = vmatpush1.bf16.msra.mxu0 %v849
        %860 = vmatprep.subr.bf16.mxu0 0
        %861 = vmatpush1.bf16.msra.mxu0 %v848
        %862 = vmatprep.subr.bf16.mxu0 0
        %863 = vmatpush1.bf16.msra.mxu0 %v847
        %864 = vmatprep.subr.bf16.mxu0 0
        %865 = vmatpush1.bf16.msra.mxu0 %v846
        %866 = vmatprep.subr.bf16.mxu0 0
        %867 = vmatpush1.bf16.msra.mxu0 %v845
        %868 = vmatprep.subr.bf16.mxu0 0
        %869 = vmatpush1.bf16.msra.mxu0 %v844
        %870 = vmatprep.subr.bf16.mxu0 0
        %871 = vmatpush1.bf16.msra.mxu0 %v843
        %872 = vmatprep.subr.bf16.mxu0 0
        %873 = vmatpush1.bf16.msra.mxu0 %v842
        %874 = vmatprep.subr.bf16.mxu0 0
        %875 = vmatpush2.bf16.msra.mxu0 0
        %876 = vmatprep.subr.bf16.mxu0 0
        %877 = vmatpush2.bf16.msra.mxu0 0
        %878 = vmatprep.subr.bf16.mxu0 0
        %879 = vmatpush2.bf16.msra.mxu0 0
        %880 = vmatprep.subr.bf16.mxu0 0
        %881 = vmatpush2.bf16.msra.mxu0 0
        %882 = vmatprep.subr.bf16.mxu0 0
        %883 = vmatpush2.bf16.msra.mxu0 0
        %884 = vmatprep.subr.bf16.mxu0 0
        %885 = vmatpush2.bf16.msra.mxu0 0
        %886 = vmatprep.subr.bf16.mxu0 0
        %887 = vmatpush2.bf16.msra.mxu0 0
        %888 = vmatprep.subr.bf16.mxu0 0
        %889 = vmatpush2.bf16.msra.mxu0 0
        %890 = vmatprep.mubr.bf16.mxu0 0
        %891 = vmatmul.mubr.bf16.gmra.mxu0 %v803
        %v892 = vpop.f32.mrf.mxu0
        %v893 = vadd.f32 %v808, %v892
        %v894 = vpop.f32.mrf.mxu0
        %v895 = vpop.f32.mrf.mxu0
        %v896 = vadd.f32 %v808, %v895
        %v897 = vpop.f32.mrf.mxu0
        %898 = vdwg.mxu0
        %v899 = vld [vmem:[%s727] sm:$0xf]
        %v900 = vld [vmem:[%s727 + $0x4] sm:$0xf]
        %v901 = vld [vmem:[%s727 + $0x8] sm:$0xf]
        %v902 = vld [vmem:[%s727 + $0xc] sm:$0xf]
        %v903 = vld [vmem:[%s727 + $0x10] sm:$0xf]
        %v904 = vld [vmem:[%s727 + $0x14] sm:$0xf]
        %v905 = vld [vmem:[%s727 + $0x18] sm:$0xf]
        %v906 = vld [vmem:[%s727 + $0x1c] sm:$0xf]
        %v907 = vld [vmem:[%s727 + $0x20] sm:$0xf]
        %v908 = vld [vmem:[%s727 + $0x24] sm:$0xf]
        %v909 = vld [vmem:[%s727 + $0x28] sm:$0xf]
        %v910 = vld [vmem:[%s727 + $0x2c] sm:$0xf]
        %v911 = vld [vmem:[%s727 + $0x30] sm:$0xf]
        %v912 = vld [vmem:[%s727 + $0x34] sm:$0xf]
        %v913 = vld [vmem:[%s727 + $0x38] sm:$0xf]
        %v914 = vld [vmem:[%s727 + $0x3c] sm:$0xf]
        %v915 = vld [vmem:[%s730] sm:$0x1]
        %v917 = vlaneseq
        %v918 = vshrl.u32 %v917, 7
        %v919 = vsub.s32 0, %v918
        %v920 = vrot.slane %v915, %v919
        %v938 = vunpack.c.l.b16 %v899
        %v939 = vunpack.c.l.b16 %v900
        %v940 = vunpack.c.l.b16 %v901
        %v941 = vunpack.c.l.b16 %v902
        %v942 = vunpack.c.l.b16 %v903
        %v943 = vunpack.c.l.b16 %v904
        %v944 = vunpack.c.l.b16 %v905
        %v945 = vunpack.c.l.b16 %v906
        %v946 = vunpack.c.l.b16 %v907
        %v947 = vunpack.c.l.b16 %v908
        %v948 = vunpack.c.l.b16 %v909
        %v949 = vunpack.c.l.b16 %v910
        %v950 = vunpack.c.l.b16 %v911
        %v951 = vunpack.c.l.b16 %v912
        %v952 = vunpack.c.l.b16 %v913
        %v953 = vunpack.c.l.b16 %v914
        %v954 = vpack.c.b16 %v939, %v938
        %v955 = vpack.c.b16 %v941, %v940
        %v956 = vpack.c.b16 %v943, %v942
        %v957 = vpack.c.b16 %v945, %v944
        %v958 = vpack.c.b16 %v947, %v946
        %v959 = vpack.c.b16 %v949, %v948
        %v960 = vpack.c.b16 %v951, %v950
        %v961 = vpack.c.b16 %v953, %v952
        %970 = vmatprep.subr.bf16.mxu0 0
        %971 = vmatpush1.bf16.msra.mxu0 %v961
        %972 = vmatprep.subr.bf16.mxu0 0
        %973 = vmatpush1.bf16.msra.mxu0 %v960
        %974 = vmatprep.subr.bf16.mxu0 0
        %975 = vmatpush1.bf16.msra.mxu0 %v959
        %976 = vmatprep.subr.bf16.mxu0 0
        %977 = vmatpush1.bf16.msra.mxu0 %v958
        %978 = vmatprep.subr.bf16.mxu0 0
        %979 = vmatpush1.bf16.msra.mxu0 %v957
        %980 = vmatprep.subr.bf16.mxu0 0
        %981 = vmatpush1.bf16.msra.mxu0 %v956
        %982 = vmatprep.subr.bf16.mxu0 0
        %983 = vmatpush1.bf16.msra.mxu0 %v955
        %984 = vmatprep.subr.bf16.mxu0 0
        %985 = vmatpush1.bf16.msra.mxu0 %v954
        %986 = vmatprep.subr.bf16.mxu0 0
        %987 = vmatpush2.bf16.msra.mxu0 0
        %988 = vmatprep.subr.bf16.mxu0 0
        %989 = vmatpush2.bf16.msra.mxu0 0
        %990 = vmatprep.subr.bf16.mxu0 0
        %991 = vmatpush2.bf16.msra.mxu0 0
        %992 = vmatprep.subr.bf16.mxu0 0
        %993 = vmatpush2.bf16.msra.mxu0 0
        %994 = vmatprep.subr.bf16.mxu0 0
        %995 = vmatpush2.bf16.msra.mxu0 0
        %996 = vmatprep.subr.bf16.mxu0 0
        %997 = vmatpush2.bf16.msra.mxu0 0
        %998 = vmatprep.subr.bf16.mxu0 0
        %999 = vmatpush2.bf16.msra.mxu0 0
        %1000 = vmatprep.subr.bf16.mxu0 0
        %1001 = vmatpush2.bf16.msra.mxu0 0
        %1002 = vmatprep.mubr.bf16.mxu0 0
        %1003 = vmatmul.mubr.bf16.gmra.mxu0 %v803
        %v1004 = vpop.f32.mrf.mxu0
        %v1005 = vadd.f32 %v920, %v1004
        %v1006 = vpop.f32.mrf.mxu0
        %v1007 = vpop.f32.mrf.mxu0
        %v1008 = vadd.f32 %v920, %v1007
        %v1009 = vpop.f32.mrf.mxu0
        %1010 = vdwg.mxu0
        %v1011 = vld [vmem:[%s735] sm:$0xf]
        %v1012 = vld [vmem:[%s735 + $0x4] sm:$0xf]
        %v1013 = vld [vmem:[%s735 + $0x8] sm:$0xf]
        %v1014 = vld [vmem:[%s735 + $0xc] sm:$0xf]
        %v1015 = vld [vmem:[%s735 + $0x10] sm:$0xf]
        %v1016 = vld [vmem:[%s735 + $0x14] sm:$0xf]
        %v1017 = vld [vmem:[%s735 + $0x18] sm:$0xf]
        %v1018 = vld [vmem:[%s735 + $0x1c] sm:$0xf]
        %v1019 = vld [vmem:[%s735 + $0x20] sm:$0xf]
        %v1020 = vld [vmem:[%s735 + $0x24] sm:$0xf]
        %v1021 = vld [vmem:[%s735 + $0x28] sm:$0xf]
        %v1022 = vld [vmem:[%s735 + $0x2c] sm:$0xf]
        %v1023 = vld [vmem:[%s735 + $0x30] sm:$0xf]
        %v1024 = vld [vmem:[%s735 + $0x34] sm:$0xf]
        %v1025 = vld [vmem:[%s735 + $0x38] sm:$0xf]
        %v1026 = vld [vmem:[%s735 + $0x3c] sm:$0xf]
        %v1027 = vld [vmem:[%s738] sm:$0x1]
        %v1029 = vlaneseq
        %v1030 = vshrl.u32 %v1029, 7
        %v1031 = vsub.s32 0, %v1030
        %v1032 = vrot.slane %v1027, %v1031
        %v1050 = vunpack.c.l.b16 %v1011
        %v1051 = vunpack.c.l.b16 %v1012
        %v1052 = vunpack.c.l.b16 %v1013
        %v1053 = vunpack.c.l.b16 %v1014
        %v1054 = vunpack.c.l.b16 %v1015
        %v1055 = vunpack.c.l.b16 %v1016
        %v1056 = vunpack.c.l.b16 %v1017
        %v1057 = vunpack.c.l.b16 %v1018
        %v1058 = vunpack.c.l.b16 %v1019
        %v1059 = vunpack.c.l.b16 %v1020
        %v1060 = vunpack.c.l.b16 %v1021
        %v1061 = vunpack.c.l.b16 %v1022
        %v1062 = vunpack.c.l.b16 %v1023
        %v1063 = vunpack.c.l.b16 %v1024
        %v1064 = vunpack.c.l.b16 %v1025
        %v1065 = vunpack.c.l.b16 %v1026
        %v1066 = vpack.c.b16 %v1051, %v1050
        %v1067 = vpack.c.b16 %v1053, %v1052
        %v1068 = vpack.c.b16 %v1055, %v1054
        %v1069 = vpack.c.b16 %v1057, %v1056
        %v1070 = vpack.c.b16 %v1059, %v1058
        %v1071 = vpack.c.b16 %v1061, %v1060
        %v1072 = vpack.c.b16 %v1063, %v1062
        %v1073 = vpack.c.b16 %v1065, %v1064
        %1082 = vmatprep.subr.bf16.mxu0 0
        %1083 = vmatpush1.bf16.msra.mxu0 %v1073
        %1084 = vmatprep.subr.bf16.mxu0 0
        %1085 = vmatpush1.bf16.msra.mxu0 %v1072
        %1086 = vmatprep.subr.bf16.mxu0 0
        %1087 = vmatpush1.bf16.msra.mxu0 %v1071
        %1088 = vmatprep.subr.bf16.mxu0 0
        %1089 = vmatpush1.bf16.msra.mxu0 %v1070
        %1090 = vmatprep.subr.bf16.mxu0 0
        %1091 = vmatpush1.bf16.msra.mxu0 %v1069
        %1092 = vmatprep.subr.bf16.mxu0 0
        %1093 = vmatpush1.bf16.msra.mxu0 %v1068
        %1094 = vmatprep.subr.bf16.mxu0 0
        %1095 = vmatpush1.bf16.msra.mxu0 %v1067
        %1096 = vmatprep.subr.bf16.mxu0 0
        %1097 = vmatpush1.bf16.msra.mxu0 %v1066
        %1098 = vmatprep.subr.bf16.mxu0 0
        %1099 = vmatpush2.bf16.msra.mxu0 0
        %1100 = vmatprep.subr.bf16.mxu0 0
        %1101 = vmatpush2.bf16.msra.mxu0 0
        %1102 = vmatprep.subr.bf16.mxu0 0
        %1103 = vmatpush2.bf16.msra.mxu0 0
        %1104 = vmatprep.subr.bf16.mxu0 0
        %1105 = vmatpush2.bf16.msra.mxu0 0
        %1106 = vmatprep.subr.bf16.mxu0 0
        %1107 = vmatpush2.bf16.msra.mxu0 0
        %1108 = vmatprep.subr.bf16.mxu0 0
        %1109 = vmatpush2.bf16.msra.mxu0 0
        %1110 = vmatprep.subr.bf16.mxu0 0
        %1111 = vmatpush2.bf16.msra.mxu0 0
        %1112 = vmatprep.subr.bf16.mxu0 0
        %1113 = vmatpush2.bf16.msra.mxu0 0
        %1114 = vmatprep.mubr.bf16.mxu0 0
        %1115 = vmatmul.mubr.bf16.gmra.mxu0 %v803
        %v1116 = vpop.f32.mrf.mxu0
        %v1117 = vadd.f32 %v1032, %v1116
        %v1118 = vpop.f32.mrf.mxu0
        %v1119 = vpop.f32.mrf.mxu0
        %v1120 = vadd.f32 %v1032, %v1119
        %v1121 = vpop.f32.mrf.mxu0
        %1122 = vdwg.mxu0
        %v1123 = vmul.f32 %v893, 0.35355338
        %v1124 = vmul.f32 %v896, 0.35355338
        %1126 = vrot.lane.b32.xlu0 %v1123, 120
        %v1127 = vpop.permute.xlu0 %1126
        %1129 = vrot.lane.b32.xlu0 %v1123, 112
        %v1130 = vpop.permute.xlu0 %1129
        %1132 = vrot.lane.b32.xlu0 %v1123, 104
        %v1133 = vpop.permute.xlu0 %1132
        %1136 = vrot.lane.b32.xlu0 %v1124, 120
        %v1137 = vpop.permute.xlu0 %1136
        %1139 = vrot.lane.b32.xlu0 %v1124, 112
        %v1140 = vpop.permute.xlu0 %1139
        %1142 = vrot.lane.b32.xlu0 %v1124, 104
        %v1143 = vpop.permute.xlu0 %1142
        %v1145 = vpack.c.bf16 %v1123, %v1123
        %v1146 = vpack.c.bf16 %v1127, %v1127
        %v1147 = vpack.c.bf16 %v1130, %v1130
        %v1148 = vpack.c.bf16 %v1133, %v1133
        %v1149 = vpack.c.bf16 %v1124, %v1124
        %v1150 = vpack.c.bf16 %v1137, %v1137
        %v1151 = vpack.c.bf16 %v1140, %v1140
        %v1152 = vpack.c.bf16 %v1143, %v1143
        %1154 = vrot.lane.b32.xlu0 %v1005, 120
        %v1155 = vpop.permute.xlu0 %1154
        %1157 = vrot.lane.b32.xlu0 %v1005, 112
        %v1158 = vpop.permute.xlu0 %1157
        %1160 = vrot.lane.b32.xlu0 %v1005, 104
        %v1161 = vpop.permute.xlu0 %1160
        %1164 = vrot.lane.b32.xlu0 %v1008, 120
        %v1165 = vpop.permute.xlu0 %1164
        %1167 = vrot.lane.b32.xlu0 %v1008, 112
        %v1168 = vpop.permute.xlu0 %1167
        %1170 = vrot.lane.b32.xlu0 %v1008, 104
        %v1171 = vpop.permute.xlu0 %1170
        %v1173 = vpack.c.bf16 %v1005, %v1005
        %v1174 = vpack.c.bf16 %v1155, %v1155
        %v1175 = vpack.c.bf16 %v1158, %v1158
        %v1176 = vpack.c.bf16 %v1161, %v1161
        %v1177 = vpack.c.bf16 %v1008, %v1008
        %v1178 = vpack.c.bf16 %v1165, %v1165
        %v1179 = vpack.c.bf16 %v1168, %v1168
        %v1180 = vpack.c.bf16 %v1171, %v1171
        %1182 = vrot.lane.b32.xlu0 %v1117, 120
        %v1183 = vpop.permute.xlu0 %1182
        %1185 = vrot.lane.b32.xlu0 %v1117, 112
        %v1186 = vpop.permute.xlu0 %1185
        %1188 = vrot.lane.b32.xlu0 %v1117, 104
        %v1189 = vpop.permute.xlu0 %1188
        %1192 = vrot.lane.b32.xlu0 %v1120, 120
        %v1193 = vpop.permute.xlu0 %1192
        %1195 = vrot.lane.b32.xlu0 %v1120, 112
        %v1196 = vpop.permute.xlu0 %1195
        %1198 = vrot.lane.b32.xlu0 %v1120, 104
        %v1199 = vpop.permute.xlu0 %1198
        %v1201 = vpack.c.bf16 %v1117, %v1117
        %v1202 = vpack.c.bf16 %v1183, %v1183
        %v1203 = vpack.c.bf16 %v1186, %v1186
        %v1204 = vpack.c.bf16 %v1189, %v1189
        %v1205 = vpack.c.bf16 %v1120, %v1120
        %v1206 = vpack.c.bf16 %v1193, %v1193
        %v1207 = vpack.c.bf16 %v1196, %v1196
        %v1208 = vpack.c.bf16 %v1199, %v1199
        %vm1209 = vcmask 64512
        %v1211 = vsel %vm1209, %v1145, 0
        %v1214 = vsel %vm1209, %v1173, 0
        %1216 = vmatprep.subr.bf16.mxu0 0
        %1217 = vmatpush1.bf16.xpose.msra.mxu0 0
        %1218 = vmatprep.subr.bf16.mxu0 0
        %1219 = vmatpush1.bf16.xpose.msra.mxu0 0
        %1220 = vmatprep.subr.bf16.mxu0 0
        %1221 = vmatpush1.bf16.xpose.msra.mxu0 0
        %1222 = vmatprep.subr.bf16.mxu0 0
        %1223 = vmatpush1.bf16.xpose.msra.mxu0 0
        %1224 = vmatprep.subr.bf16.mxu0 0
        %1225 = vmatpush1.bf16.xpose.msra.mxu0 0
        %1226 = vmatprep.subr.bf16.mxu0 0
        %1227 = vmatpush1.bf16.xpose.msra.mxu0 0
        %1228 = vmatprep.subr.bf16.mxu0 0
        %1229 = vmatpush1.bf16.xpose.msra.mxu0 0
        %1230 = vmatprep.subr.bf16.mxu0 0
        %1231 = vmatpush1.bf16.xpose.msra.mxu0 %v1214
        %1232 = vmatprep.subr.bf16.mxu0 0
        %1233 = vmatpush2.bf16.xpose.msra.mxu0 0
        %1234 = vmatprep.subr.bf16.mxu0 0
        %1235 = vmatpush2.bf16.xpose.msra.mxu0 0
        %1236 = vmatprep.subr.bf16.mxu0 0
        %1237 = vmatpush2.bf16.xpose.msra.mxu0 0
        %1238 = vmatprep.subr.bf16.mxu0 0
        %1239 = vmatpush2.bf16.xpose.msra.mxu0 0
        %1240 = vmatprep.subr.bf16.mxu0 0
        %1241 = vmatpush2.bf16.xpose.msra.mxu0 0
        %1242 = vmatprep.subr.bf16.mxu0 0
        %1243 = vmatpush2.bf16.xpose.msra.mxu0 0
        %1244 = vmatprep.subr.bf16.mxu0 0
        %1245 = vmatpush2.bf16.xpose.msra.mxu0 0
        %1246 = vmatprep.subr.bf16.mxu0 0
        %1247 = vmatpush2.bf16.xpose.msra.mxu0 0
        %1248 = vmatprep.mubr.bf16.mxu0 0
        %1249 = vmatmul.mubr.bf16.gmra.mxu0 %v1211
        %v1250 = vpop.f32.mrf.mxu0
        %v1251 = vadd.f32 0.0, %v1250
        %v1252 = vpop.f32.mrf.mxu0
        %v1253 = vpop.f32.mrf.mxu0
        %v1254 = vpop.f32.mrf.mxu0
        %1255 = vdwg.mxu0
        %v1257 = vsel %vm1209, %v1146, 0
        %v1260 = vsel %vm1209, %v1174, 0
        %1262 = vmatprep.subr.bf16.mxu0 0
        %1263 = vmatpush1.bf16.xpose.msra.mxu0 0
        %1264 = vmatprep.subr.bf16.mxu0 0
        %1265 = vmatpush1.bf16.xpose.msra.mxu0 0
        %1266 = vmatprep.subr.bf16.mxu0 0
        %1267 = vmatpush1.bf16.xpose.msra.mxu0 0
        %1268 = vmatprep.subr.bf16.mxu0 0
        %1269 = vmatpush1.bf16.xpose.msra.mxu0 0
        %1270 = vmatprep.subr.bf16.mxu0 0
        %1271 = vmatpush1.bf16.xpose.msra.mxu0 0
        %1272 = vmatprep.subr.bf16.mxu0 0
        %1273 = vmatpush1.bf16.xpose.msra.mxu0 0
        %1274 = vmatprep.subr.bf16.mxu0 0
        %1275 = vmatpush1.bf16.xpose.msra.mxu0 0
        %1276 = vmatprep.subr.bf16.mxu0 0
        %1277 = vmatpush1.bf16.xpose.msra.mxu0 %v1260
        %1278 = vmatprep.subr.bf16.mxu0 0
        %1279 = vmatpush2.bf16.xpose.msra.mxu0 0
        %1280 = vmatprep.subr.bf16.mxu0 0
        %1281 = vmatpush2.bf16.xpose.msra.mxu0 0
        %1282 = vmatprep.subr.bf16.mxu0 0
        %1283 = vmatpush2.bf16.xpose.msra.mxu0 0
        %1284 = vmatprep.subr.bf16.mxu0 0
        %1285 = vmatpush2.bf16.xpose.msra.mxu0 0
        %1286 = vmatprep.subr.bf16.mxu0 0
        %1287 = vmatpush2.bf16.xpose.msra.mxu0 0
        %1288 = vmatprep.subr.bf16.mxu0 0
        %1289 = vmatpush2.bf16.xpose.msra.mxu0 0
        %1290 = vmatprep.subr.bf16.mxu0 0
        %1291 = vmatpush2.bf16.xpose.msra.mxu0 0
        %1292 = vmatprep.subr.bf16.mxu0 0
        %1293 = vmatpush2.bf16.xpose.msra.mxu0 0
        %1294 = vmatprep.mubr.bf16.mxu0 0
        %1295 = vmatmul.mubr.bf16.gmra.mxu0 %v1257
        %v1296 = vpop.f32.mrf.mxu0
        %v1297 = vadd.f32 0.0, %v1296
        %v1298 = vpop.f32.mrf.mxu0
        %v1299 = vpop.f32.mrf.mxu0
        %v1300 = vpop.f32.mrf.mxu0
        %1301 = vdwg.mxu0
        %v1303 = vsel %vm1209, %v1147, 0
        %v1306 = vsel %vm1209, %v1175, 0
        %1308 = vmatprep.subr.bf16.mxu0 0
        %1309 = vmatpush1.bf16.xpose.msra.mxu0 0
        %1310 = vmatprep.subr.bf16.mxu0 0
        %1311 = vmatpush1.bf16.xpose.msra.mxu0 0
        %1312 = vmatprep.subr.bf16.mxu0 0
        %1313 = vmatpush1.bf16.xpose.msra.mxu0 0
        %1314 = vmatprep.subr.bf16.mxu0 0
        %1315 = vmatpush1.bf16.xpose.msra.mxu0 0
        %1316 = vmatprep.subr.bf16.mxu0 0
        %1317 = vmatpush1.bf16.xpose.msra.mxu0 0
        %1318 = vmatprep.subr.bf16.mxu0 0
        %1319 = vmatpush1.bf16.xpose.msra.mxu0 0
        %1320 = vmatprep.subr.bf16.mxu0 0
        %1321 = vmatpush1.bf16.xpose.msra.mxu0 0
        %1322 = vmatprep.subr.bf16.mxu0 0
        %1323 = vmatpush1.bf16.xpose.msra.mxu0 %v1306
        %1324 = vmatprep.subr.bf16.mxu0 0
        %1325 = vmatpush2.bf16.xpose.msra.mxu0 0
        %1326 = vmatprep.subr.bf16.mxu0 0
        %1327 = vmatpush2.bf16.xpose.msra.mxu0 0
        %1328 = vmatprep.subr.bf16.mxu0 0
        %1329 = vmatpush2.bf16.xpose.msra.mxu0 0
        %1330 = vmatprep.subr.bf16.mxu0 0
        %1331 = vmatpush2.bf16.xpose.msra.mxu0 0
        %1332 = vmatprep.subr.bf16.mxu0 0
        %1333 = vmatpush2.bf16.xpose.msra.mxu0 0
        %1334 = vmatprep.subr.bf16.mxu0 0
        %1335 = vmatpush2.bf16.xpose.msra.mxu0 0
        %1336 = vmatprep.subr.bf16.mxu0 0
        %1337 = vmatpush2.bf16.xpose.msra.mxu0 0
        %1338 = vmatprep.subr.bf16.mxu0 0
        %1339 = vmatpush2.bf16.xpose.msra.mxu0 0
        %1340 = vmatprep.mubr.bf16.mxu0 0
        %1341 = vmatmul.mubr.bf16.gmra.mxu0 %v1303
        %v1342 = vpop.f32.mrf.mxu0
        %v1343 = vadd.f32 0.0, %v1342
        %v1344 = vpop.f32.mrf.mxu0
        %v1345 = vpop.f32.mrf.mxu0
        %v1346 = vpop.f32.mrf.mxu0
        %1347 = vdwg.mxu0
        %v1349 = vsel %vm1209, %v1148, 0
        %v1352 = vsel %vm1209, %v1176, 0
        %1354 = vmatprep.subr.bf16.mxu0 0
        %1355 = vmatpush1.bf16.xpose.msra.mxu0 0
        %1356 = vmatprep.subr.bf16.mxu0 0
        %1357 = vmatpush1.bf16.xpose.msra.mxu0 0
        %1358 = vmatprep.subr.bf16.mxu0 0
        %1359 = vmatpush1.bf16.xpose.msra.mxu0 0
        %1360 = vmatprep.subr.bf16.mxu0 0
        %1361 = vmatpush1.bf16.xpose.msra.mxu0 0
        %1362 = vmatprep.subr.bf16.mxu0 0
        %1363 = vmatpush1.bf16.xpose.msra.mxu0 0
        %1364 = vmatprep.subr.bf16.mxu0 0
        %1365 = vmatpush1.bf16.xpose.msra.mxu0 0
        %1366 = vmatprep.subr.bf16.mxu0 0
        %1367 = vmatpush1.bf16.xpose.msra.mxu0 0
        %1368 = vmatprep.subr.bf16.mxu0 0
        %1369 = vmatpush1.bf16.xpose.msra.mxu0 %v1352
        %1370 = vmatprep.subr.bf16.mxu0 0
        %1371 = vmatpush2.bf16.xpose.msra.mxu0 0
        %1372 = vmatprep.subr.bf16.mxu0 0
        %1373 = vmatpush2.bf16.xpose.msra.mxu0 0
        %1374 = vmatprep.subr.bf16.mxu0 0
        %1375 = vmatpush2.bf16.xpose.msra.mxu0 0
        %1376 = vmatprep.subr.bf16.mxu0 0
        %1377 = vmatpush2.bf16.xpose.msra.mxu0 0
        %1378 = vmatprep.subr.bf16.mxu0 0
        %1379 = vmatpush2.bf16.xpose.msra.mxu0 0
        %1380 = vmatprep.subr.bf16.mxu0 0
        %1381 = vmatpush2.bf16.xpose.msra.mxu0 0
        %1382 = vmatprep.subr.bf16.mxu0 0
        %1383 = vmatpush2.bf16.xpose.msra.mxu0 0
        %1384 = vmatprep.subr.bf16.mxu0 0
        %1385 = vmatpush2.bf16.xpose.msra.mxu0 0
        %1386 = vmatprep.mubr.bf16.mxu0 0
        %1387 = vmatmul.mubr.bf16.gmra.mxu0 %v1349
        %v1388 = vpop.f32.mrf.mxu0
        %v1389 = vadd.f32 0.0, %v1388
        %v1390 = vpop.f32.mrf.mxu0
        %v1391 = vpop.f32.mrf.mxu0
        %v1392 = vpop.f32.mrf.mxu0
        %1393 = vdwg.mxu0
        %v1395 = vsel %vm1209, %v1149, 0
        %v1398 = vsel %vm1209, %v1177, 0
        %1400 = vmatprep.subr.bf16.mxu0 0
        %1401 = vmatpush1.bf16.xpose.msra.mxu0 0
        %1402 = vmatprep.subr.bf16.mxu0 0
        %1403 = vmatpush1.bf16.xpose.msra.mxu0 0
        %1404 = vmatprep.subr.bf16.mxu0 0
        %1405 = vmatpush1.bf16.xpose.msra.mxu0 0
        %1406 = vmatprep.subr.bf16.mxu0 0
        %1407 = vmatpush1.bf16.xpose.msra.mxu0 0
        %1408 = vmatprep.subr.bf16.mxu0 0
        %1409 = vmatpush1.bf16.xpose.msra.mxu0 0
        %1410 = vmatprep.subr.bf16.mxu0 0
        %1411 = vmatpush1.bf16.xpose.msra.mxu0 0
        %1412 = vmatprep.subr.bf16.mxu0 0
        %1413 = vmatpush1.bf16.xpose.msra.mxu0 0
        %1414 = vmatprep.subr.bf16.mxu0 0
        %1415 = vmatpush1.bf16.xpose.msra.mxu0 %v1398
        %1416 = vmatprep.subr.bf16.mxu0 0
        %1417 = vmatpush2.bf16.xpose.msra.mxu0 0
        %1418 = vmatprep.subr.bf16.mxu0 0
        %1419 = vmatpush2.bf16.xpose.msra.mxu0 0
        %1420 = vmatprep.subr.bf16.mxu0 0
        %1421 = vmatpush2.bf16.xpose.msra.mxu0 0
        %1422 = vmatprep.subr.bf16.mxu0 0
        %1423 = vmatpush2.bf16.xpose.msra.mxu0 0
        %1424 = vmatprep.subr.bf16.mxu0 0
        %1425 = vmatpush2.bf16.xpose.msra.mxu0 0
        %1426 = vmatprep.subr.bf16.mxu0 0
        %1427 = vmatpush2.bf16.xpose.msra.mxu0 0
        %1428 = vmatprep.subr.bf16.mxu0 0
        %1429 = vmatpush2.bf16.xpose.msra.mxu0 0
        %1430 = vmatprep.subr.bf16.mxu0 0
        %1431 = vmatpush2.bf16.xpose.msra.mxu0 0
        %1432 = vmatprep.mubr.bf16.mxu0 0
        %1433 = vmatmul.mubr.bf16.gmra.mxu0 %v1395
        %v1434 = vpop.f32.mrf.mxu0
        %v1435 = vadd.f32 0.0, %v1434
        %v1436 = vpop.f32.mrf.mxu0
        %v1437 = vpop.f32.mrf.mxu0
        %v1438 = vpop.f32.mrf.mxu0
        %1439 = vdwg.mxu0
        %v1441 = vsel %vm1209, %v1150, 0
        %v1444 = vsel %vm1209, %v1178, 0
        %1446 = vmatprep.subr.bf16.mxu0 0
        %1447 = vmatpush1.bf16.xpose.msra.mxu0 0
        %1448 = vmatprep.subr.bf16.mxu0 0
        %1449 = vmatpush1.bf16.xpose.msra.mxu0 0
        %1450 = vmatprep.subr.bf16.mxu0 0
        %1451 = vmatpush1.bf16.xpose.msra.mxu0 0
        %1452 = vmatprep.subr.bf16.mxu0 0
        %1453 = vmatpush1.bf16.xpose.msra.mxu0 0
        %1454 = vmatprep.subr.bf16.mxu0 0
        %1455 = vmatpush1.bf16.xpose.msra.mxu0 0
        %1456 = vmatprep.subr.bf16.mxu0 0
        %1457 = vmatpush1.bf16.xpose.msra.mxu0 0
        %1458 = vmatprep.subr.bf16.mxu0 0
        %1459 = vmatpush1.bf16.xpose.msra.mxu0 0
        %1460 = vmatprep.subr.bf16.mxu0 0
        %1461 = vmatpush1.bf16.xpose.msra.mxu0 %v1444
        %1462 = vmatprep.subr.bf16.mxu0 0
        %1463 = vmatpush2.bf16.xpose.msra.mxu0 0
        %1464 = vmatprep.subr.bf16.mxu0 0
        %1465 = vmatpush2.bf16.xpose.msra.mxu0 0
        %1466 = vmatprep.subr.bf16.mxu0 0
        %1467 = vmatpush2.bf16.xpose.msra.mxu0 0
        %1468 = vmatprep.subr.bf16.mxu0 0
        %1469 = vmatpush2.bf16.xpose.msra.mxu0 0
        %1470 = vmatprep.subr.bf16.mxu0 0
        %1471 = vmatpush2.bf16.xpose.msra.mxu0 0
        %1472 = vmatprep.subr.bf16.mxu0 0
        %1473 = vmatpush2.bf16.xpose.msra.mxu0 0
        %1474 = vmatprep.subr.bf16.mxu0 0
        %1475 = vmatpush2.bf16.xpose.msra.mxu0 0
        %1476 = vmatprep.subr.bf16.mxu0 0
        %1477 = vmatpush2.bf16.xpose.msra.mxu0 0
        %1478 = vmatprep.mubr.bf16.mxu0 0
        %1479 = vmatmul.mubr.bf16.gmra.mxu0 %v1441
        %v1480 = vpop.f32.mrf.mxu0
        %v1481 = vadd.f32 0.0, %v1480
        %v1482 = vpop.f32.mrf.mxu0
        %v1483 = vpop.f32.mrf.mxu0
        %v1484 = vpop.f32.mrf.mxu0
        %1485 = vdwg.mxu0
        %v1487 = vsel %vm1209, %v1151, 0
        %v1490 = vsel %vm1209, %v1179, 0
        %1492 = vmatprep.subr.bf16.mxu0 0
        %1493 = vmatpush1.bf16.xpose.msra.mxu0 0
        %1494 = vmatprep.subr.bf16.mxu0 0
        %1495 = vmatpush1.bf16.xpose.msra.mxu0 0
        %1496 = vmatprep.subr.bf16.mxu0 0
        %1497 = vmatpush1.bf16.xpose.msra.mxu0 0
        %1498 = vmatprep.subr.bf16.mxu0 0
        %1499 = vmatpush1.bf16.xpose.msra.mxu0 0
        %1500 = vmatprep.subr.bf16.mxu0 0
        %1501 = vmatpush1.bf16.xpose.msra.mxu0 0
        %1502 = vmatprep.subr.bf16.mxu0 0
        %1503 = vmatpush1.bf16.xpose.msra.mxu0 0
        %1504 = vmatprep.subr.bf16.mxu0 0
        %1505 = vmatpush1.bf16.xpose.msra.mxu0 0
        %1506 = vmatprep.subr.bf16.mxu0 0
        %1507 = vmatpush1.bf16.xpose.msra.mxu0 %v1490
        %1508 = vmatprep.subr.bf16.mxu0 0
        %1509 = vmatpush2.bf16.xpose.msra.mxu0 0
        %1510 = vmatprep.subr.bf16.mxu0 0
        %1511 = vmatpush2.bf16.xpose.msra.mxu0 0
        %1512 = vmatprep.subr.bf16.mxu0 0
        %1513 = vmatpush2.bf16.xpose.msra.mxu0 0
        %1514 = vmatprep.subr.bf16.mxu0 0
        %1515 = vmatpush2.bf16.xpose.msra.mxu0 0
        %1516 = vmatprep.subr.bf16.mxu0 0
        %1517 = vmatpush2.bf16.xpose.msra.mxu0 0
        %1518 = vmatprep.subr.bf16.mxu0 0
        %1519 = vmatpush2.bf16.xpose.msra.mxu0 0
        %1520 = vmatprep.subr.bf16.mxu0 0
        %1521 = vmatpush2.bf16.xpose.msra.mxu0 0
        %1522 = vmatprep.subr.bf16.mxu0 0
        %1523 = vmatpush2.bf16.xpose.msra.mxu0 0
        %1524 = vmatprep.mubr.bf16.mxu0 0
        %1525 = vmatmul.mubr.bf16.gmra.mxu0 %v1487
        %v1526 = vpop.f32.mrf.mxu0
        %v1527 = vadd.f32 0.0, %v1526
        %v1528 = vpop.f32.mrf.mxu0
        %v1529 = vpop.f32.mrf.mxu0
        %v1530 = vpop.f32.mrf.mxu0
        %1531 = vdwg.mxu0
        %v1533 = vsel %vm1209, %v1152, 0
        %v1536 = vsel %vm1209, %v1180, 0
        %1538 = vmatprep.subr.bf16.mxu0 0
        %1539 = vmatpush1.bf16.xpose.msra.mxu0 0
        %1540 = vmatprep.subr.bf16.mxu0 0
        %1541 = vmatpush1.bf16.xpose.msra.mxu0 0
        %1542 = vmatprep.subr.bf16.mxu0 0
        %1543 = vmatpush1.bf16.xpose.msra.mxu0 0
        %1544 = vmatprep.subr.bf16.mxu0 0
        %1545 = vmatpush1.bf16.xpose.msra.mxu0 0
        %1546 = vmatprep.subr.bf16.mxu0 0
        %1547 = vmatpush1.bf16.xpose.msra.mxu0 0
        %1548 = vmatprep.subr.bf16.mxu0 0
        %1549 = vmatpush1.bf16.xpose.msra.mxu0 0
        %1550 = vmatprep.subr.bf16.mxu0 0
        %1551 = vmatpush1.bf16.xpose.msra.mxu0 0
        %1552 = vmatprep.subr.bf16.mxu0 0
        %1553 = vmatpush1.bf16.xpose.msra.mxu0 %v1536
        %1554 = vmatprep.subr.bf16.mxu0 0
        %1555 = vmatpush2.bf16.xpose.msra.mxu0 0
        %1556 = vmatprep.subr.bf16.mxu0 0
        %1557 = vmatpush2.bf16.xpose.msra.mxu0 0
        %1558 = vmatprep.subr.bf16.mxu0 0
        %1559 = vmatpush2.bf16.xpose.msra.mxu0 0
        %1560 = vmatprep.subr.bf16.mxu0 0
        %1561 = vmatpush2.bf16.xpose.msra.mxu0 0
        %1562 = vmatprep.subr.bf16.mxu0 0
        %1563 = vmatpush2.bf16.xpose.msra.mxu0 0
        %1564 = vmatprep.subr.bf16.mxu0 0
        %1565 = vmatpush2.bf16.xpose.msra.mxu0 0
        %1566 = vmatprep.subr.bf16.mxu0 0
        %1567 = vmatpush2.bf16.xpose.msra.mxu0 0
        %1568 = vmatprep.subr.bf16.mxu0 0
        %1569 = vmatpush2.bf16.xpose.msra.mxu0 0
        %1570 = vmatprep.mubr.bf16.mxu0 0
        %1571 = vmatmul.mubr.bf16.gmra.mxu0 %v1533
        %v1572 = vpop.f32.mrf.mxu0
        %v1573 = vadd.f32 0.0, %v1572
        %v1574 = vpop.f32.mrf.mxu0
        %v1575 = vpop.f32.mrf.mxu0
        %v1576 = vpop.f32.mrf.mxu0
        %1577 = vdwg.mxu0
        %v1578 = vlaneseq
        %v1579 = vshrl.u32 %v1578, 7
        %v1580 = vlaneseq
        %v1581 = vand.u32 %v1580, 127
        %vm1582 = vcmp.ge.s32.totalorder %v1579, %v1581
        %v1583 = vsel %vm1582, 1, 0
        %vm1584 = vcmp.eq.s32.totalorder %v1583, 1
        %v1585 = vsel %vm1584, %v1251, -1e+30
        %v1586 = vsel %vm1584, %v1297, -1e+30
        %v1587 = vsel %vm1584, %v1343, -1e+30
        %v1588 = vsel %vm1584, %v1389, -1e+30
        %v1589 = vsel %vm1584, %v1435, -1e+30
        %v1590 = vsel %vm1584, %v1481, -1e+30
        %v1591 = vsel %vm1584, %v1527, -1e+30
        %v1592 = vsel %vm1584, %v1573, -1e+30
        %v1593 = vsel %vm1209, %v1585, -inf
        %1594 = vmax.xlane.f32.xlu0 %v1593
        %v1595 = vpop.xlane.xlu0 %1594
        %v1596 = vsel %vm1209, %v1586, -inf
        %1597 = vmax.xlane.f32.xlu0 %v1596
        %v1598 = vpop.xlane.xlu0 %1597
        %v1599 = vsel %vm1209, %v1587, -inf
        %1600 = vmax.xlane.f32.xlu0 %v1599
        %v1601 = vpop.xlane.xlu0 %1600
        %v1602 = vsel %vm1209, %v1588, -inf
        %1603 = vmax.xlane.f32.xlu0 %v1602
        %v1604 = vpop.xlane.xlu0 %1603
        %v1605 = vsel %vm1209, %v1589, -inf
        %1606 = vmax.xlane.f32.xlu0 %v1605
        %v1607 = vpop.xlane.xlu0 %1606
        %v1608 = vsel %vm1209, %v1590, -inf
        %1609 = vmax.xlane.f32.xlu0 %v1608
        %v1610 = vpop.xlane.xlu0 %1609
        %v1611 = vsel %vm1209, %v1591, -inf
        %1612 = vmax.xlane.f32.xlu0 %v1611
        %v1613 = vpop.xlane.xlu0 %1612
        %v1614 = vsel %vm1209, %v1592, -inf
        %1615 = vmax.xlane.f32.xlu0 %v1614
        %v1616 = vpop.xlane.xlu0 %1615
        %v1617 = vsub.f32 %v1585, %v1595
        %v1618 = vsub.f32 %v1586, %v1598
        %v1619 = vsub.f32 %v1587, %v1601
        %v1620 = vsub.f32 %v1588, %v1604
        %v1621 = vsub.f32 %v1589, %v1607
        %v1622 = vsub.f32 %v1590, %v1610
        %v1623 = vsub.f32 %v1591, %v1613
        %v1624 = vsub.f32 %v1592, %v1616
        %v1625 = vmul.f32 %v1617, 1.442695
        %v1626 = vpow.pop %v1625
        %v1627 = vmul.f32 %v1618, 1.442695
        %v1628 = vpow.pop %v1627
        %v1629 = vmul.f32 %v1619, 1.442695
        %v1630 = vpow.pop %v1629
        %v1631 = vmul.f32 %v1620, 1.442695
        %v1632 = vpow.pop %v1631
        %v1633 = vmul.f32 %v1621, 1.442695
        %v1634 = vpow.pop %v1633
        %v1635 = vmul.f32 %v1622, 1.442695
        %v1636 = vpow.pop %v1635
        %v1637 = vmul.f32 %v1623, 1.442695
        %v1638 = vpow.pop %v1637
        %v1639 = vmul.f32 %v1624, 1.442695
        %v1640 = vpow.pop %v1639
        %v1641 = vsel %vm1209, %v1626, 0.0
        %1642 = vadd.xlane.f32.xlu0 %v1641
        %v1643 = vpop.xlane.xlu0 %1642
        %v1644 = vsel %vm1209, %v1628, 0.0
        %1645 = vadd.xlane.f32.xlu0 %v1644
        %v1646 = vpop.xlane.xlu0 %1645
        %v1647 = vsel %vm1209, %v1630, 0.0
        %1648 = vadd.xlane.f32.xlu0 %v1647
        %v1649 = vpop.xlane.xlu0 %1648
        %v1650 = vsel %vm1209, %v1632, 0.0
        %1651 = vadd.xlane.f32.xlu0 %v1650
        %v1652 = vpop.xlane.xlu0 %1651
        %v1653 = vsel %vm1209, %v1634, 0.0
        %1654 = vadd.xlane.f32.xlu0 %v1653
        %v1655 = vpop.xlane.xlu0 %1654
        %v1656 = vsel %vm1209, %v1636, 0.0
        %1657 = vadd.xlane.f32.xlu0 %v1656
        %v1658 = vpop.xlane.xlu0 %1657
        %v1659 = vsel %vm1209, %v1638, 0.0
        %1660 = vadd.xlane.f32.xlu0 %v1659
        %v1661 = vpop.xlane.xlu0 %1660
        %v1662 = vsel %vm1209, %v1640, 0.0
        %1663 = vadd.xlane.f32.xlu0 %v1662
        %v1664 = vpop.xlane.xlu0 %1663
        %v1665 = vrcp.pop %v1643
        %v1666 = vrcp.pop %v1646
        %v1667 = vrcp.pop %v1649
        %v1668 = vrcp.pop %v1652
        %v1669 = vrcp.pop %v1655
        %v1670 = vrcp.pop %v1658
        %v1671 = vrcp.pop %v1661
        %v1672 = vrcp.pop %v1664
        %v1673 = vmul.f32 %v1626, %v1665
        %v1674 = vmul.f32 %v1628, %v1666
        %v1675 = vmul.f32 %v1630, %v1667
        %v1676 = vmul.f32 %v1632, %v1668
        %v1677 = vmul.f32 %v1634, %v1669
        %v1678 = vmul.f32 %v1636, %v1670
        %v1679 = vmul.f32 %v1638, %v1671
        %v1680 = vmul.f32 %v1640, %v1672
        %v1681 = vpack.c.bf16 %v1673, %v1673
        %v1682 = vpack.c.bf16 %v1674, %v1674
        %v1683 = vpack.c.bf16 %v1675, %v1675
        %v1684 = vpack.c.bf16 %v1676, %v1676
        %v1685 = vpack.c.bf16 %v1677, %v1677
        %v1686 = vpack.c.bf16 %v1678, %v1678
        %v1687 = vpack.c.bf16 %v1679, %v1679
        %v1688 = vpack.c.bf16 %v1680, %v1680
        %v1690 = vsel %vm1209, %v1681, 0
        %vm1692 = vcmask 1043456
        %v1694 = vsel %vm1692, %v1201, 0
        %1696 = vmatprep.subr.bf16.mxu0 0
        %1697 = vmatpush1.bf16.msra.mxu0 0
        %1698 = vmatprep.subr.bf16.mxu0 0
        %1699 = vmatpush1.bf16.msra.mxu0 0
        %1700 = vmatprep.subr.bf16.mxu0 0
        %1701 = vmatpush1.bf16.msra.mxu0 0
        %1702 = vmatprep.subr.bf16.mxu0 0
        %1703 = vmatpush1.bf16.msra.mxu0 0
        %1704 = vmatprep.subr.bf16.mxu0 0
        %1705 = vmatpush1.bf16.msra.mxu0 0
        %1706 = vmatprep.subr.bf16.mxu0 0
        %1707 = vmatpush1.bf16.msra.mxu0 0
        %1708 = vmatprep.subr.bf16.mxu0 0
        %1709 = vmatpush1.bf16.msra.mxu0 0
        %1710 = vmatprep.subr.bf16.mxu0 0
        %1711 = vmatpush1.bf16.msra.mxu0 %v1694
        %1712 = vmatprep.subr.bf16.mxu0 0
        %1713 = vmatpush2.bf16.msra.mxu0 0
        %1714 = vmatprep.subr.bf16.mxu0 0
        %1715 = vmatpush2.bf16.msra.mxu0 0
        %1716 = vmatprep.subr.bf16.mxu0 0
        %1717 = vmatpush2.bf16.msra.mxu0 0
        %1718 = vmatprep.subr.bf16.mxu0 0
        %1719 = vmatpush2.bf16.msra.mxu0 0
        %1720 = vmatprep.subr.bf16.mxu0 0
        %1721 = vmatpush2.bf16.msra.mxu0 0
        %1722 = vmatprep.subr.bf16.mxu0 0
        %1723 = vmatpush2.bf16.msra.mxu0 0
        %1724 = vmatprep.subr.bf16.mxu0 0
        %1725 = vmatpush2.bf16.msra.mxu0 0
        %1726 = vmatprep.subr.bf16.mxu0 0
        %1727 = vmatpush2.bf16.msra.mxu0 0
        %1728 = vmatprep.mubr.bf16.mxu0 0
        %1729 = vmatmul.mubr.bf16.gmra.mxu0 %v1690
        %v1730 = vpop.f32.mrf.mxu0
        %v1731 = vadd.f32 0.0, %v1730
        %v1732 = vpop.f32.mrf.mxu0
        %v1733 = vpop.f32.mrf.mxu0
        %v1734 = vpop.f32.mrf.mxu0
        %1735 = vdwg.mxu0
        %v1737 = vsel %vm1209, %v1682, 0
        %v1740 = vsel %vm1692, %v1202, 0
        %1742 = vmatprep.subr.bf16.mxu0 0
        %1743 = vmatpush1.bf16.msra.mxu0 0
        %1744 = vmatprep.subr.bf16.mxu0 0
        %1745 = vmatpush1.bf16.msra.mxu0 0
        %1746 = vmatprep.subr.bf16.mxu0 0
        %1747 = vmatpush1.bf16.msra.mxu0 0
        %1748 = vmatprep.subr.bf16.mxu0 0
        %1749 = vmatpush1.bf16.msra.mxu0 0
        %1750 = vmatprep.subr.bf16.mxu0 0
        %1751 = vmatpush1.bf16.msra.mxu0 0
        %1752 = vmatprep.subr.bf16.mxu0 0
        %1753 = vmatpush1.bf16.msra.mxu0 0
        %1754 = vmatprep.subr.bf16.mxu0 0
        %1755 = vmatpush1.bf16.msra.mxu0 0
        %1756 = vmatprep.subr.bf16.mxu0 0
        %1757 = vmatpush1.bf16.msra.mxu0 %v1740
        %1758 = vmatprep.subr.bf16.mxu0 0
        %1759 = vmatpush2.bf16.msra.mxu0 0
        %1760 = vmatprep.subr.bf16.mxu0 0
        %1761 = vmatpush2.bf16.msra.mxu0 0
        %1762 = vmatprep.subr.bf16.mxu0 0
        %1763 = vmatpush2.bf16.msra.mxu0 0
        %1764 = vmatprep.subr.bf16.mxu0 0
        %1765 = vmatpush2.bf16.msra.mxu0 0
        %1766 = vmatprep.subr.bf16.mxu0 0
        %1767 = vmatpush2.bf16.msra.mxu0 0
        %1768 = vmatprep.subr.bf16.mxu0 0
        %1769 = vmatpush2.bf16.msra.mxu0 0
        %1770 = vmatprep.subr.bf16.mxu0 0
        %1771 = vmatpush2.bf16.msra.mxu0 0
        %1772 = vmatprep.subr.bf16.mxu0 0
        %1773 = vmatpush2.bf16.msra.mxu0 0
        %1774 = vmatprep.mubr.bf16.mxu0 0
        %1775 = vmatmul.mubr.bf16.gmra.mxu0 %v1737
        %v1776 = vpop.f32.mrf.mxu0
        %v1777 = vadd.f32 0.0, %v1776
        %v1778 = vpop.f32.mrf.mxu0
        %v1779 = vpop.f32.mrf.mxu0
        %v1780 = vpop.f32.mrf.mxu0
        %1781 = vdwg.mxu0
        %v1783 = vsel %vm1209, %v1683, 0
        %v1786 = vsel %vm1692, %v1203, 0
        %1788 = vmatprep.subr.bf16.mxu0 0
        %1789 = vmatpush1.bf16.msra.mxu0 0
        %1790 = vmatprep.subr.bf16.mxu0 0
        %1791 = vmatpush1.bf16.msra.mxu0 0
        %1792 = vmatprep.subr.bf16.mxu0 0
        %1793 = vmatpush1.bf16.msra.mxu0 0
        %1794 = vmatprep.subr.bf16.mxu0 0
        %1795 = vmatpush1.bf16.msra.mxu0 0
        %1796 = vmatprep.subr.bf16.mxu0 0
        %1797 = vmatpush1.bf16.msra.mxu0 0
        %1798 = vmatprep.subr.bf16.mxu0 0
        %1799 = vmatpush1.bf16.msra.mxu0 0
        %1800 = vmatprep.subr.bf16.mxu0 0
        %1801 = vmatpush1.bf16.msra.mxu0 0
        %1802 = vmatprep.subr.bf16.mxu0 0
        %1803 = vmatpush1.bf16.msra.mxu0 %v1786
        %1804 = vmatprep.subr.bf16.mxu0 0
        %1805 = vmatpush2.bf16.msra.mxu0 0
        %1806 = vmatprep.subr.bf16.mxu0 0
        %1807 = vmatpush2.bf16.msra.mxu0 0
        %1808 = vmatprep.subr.bf16.mxu0 0
        %1809 = vmatpush2.bf16.msra.mxu0 0
        %1810 = vmatprep.subr.bf16.mxu0 0
        %1811 = vmatpush2.bf16.msra.mxu0 0
        %1812 = vmatprep.subr.bf16.mxu0 0
        %1813 = vmatpush2.bf16.msra.mxu0 0
        %1814 = vmatprep.subr.bf16.mxu0 0
        %1815 = vmatpush2.bf16.msra.mxu0 0
        %1816 = vmatprep.subr.bf16.mxu0 0
        %1817 = vmatpush2.bf16.msra.mxu0 0
        %1818 = vmatprep.subr.bf16.mxu0 0
        %1819 = vmatpush2.bf16.msra.mxu0 0
        %1820 = vmatprep.mubr.bf16.mxu0 0
        %1821 = vmatmul.mubr.bf16.gmra.mxu0 %v1783
        %v1822 = vpop.f32.mrf.mxu0
        %v1823 = vadd.f32 0.0, %v1822
        %v1824 = vpop.f32.mrf.mxu0
        %v1825 = vpop.f32.mrf.mxu0
        %v1826 = vpop.f32.mrf.mxu0
        %1827 = vdwg.mxu0
        %v1829 = vsel %vm1209, %v1684, 0
        %v1832 = vsel %vm1692, %v1204, 0
        %1834 = vmatprep.subr.bf16.mxu0 0
        %1835 = vmatpush1.bf16.msra.mxu0 0
        %1836 = vmatprep.subr.bf16.mxu0 0
        %1837 = vmatpush1.bf16.msra.mxu0 0
        %1838 = vmatprep.subr.bf16.mxu0 0
        %1839 = vmatpush1.bf16.msra.mxu0 0
        %1840 = vmatprep.subr.bf16.mxu0 0
        %1841 = vmatpush1.bf16.msra.mxu0 0
        %1842 = vmatprep.subr.bf16.mxu0 0
        %1843 = vmatpush1.bf16.msra.mxu0 0
        %1844 = vmatprep.subr.bf16.mxu0 0
        %1845 = vmatpush1.bf16.msra.mxu0 0
        %1846 = vmatprep.subr.bf16.mxu0 0
        %1847 = vmatpush1.bf16.msra.mxu0 0
        %1848 = vmatprep.subr.bf16.mxu0 0
        %1849 = vmatpush1.bf16.msra.mxu0 %v1832
        %1850 = vmatprep.subr.bf16.mxu0 0
        %1851 = vmatpush2.bf16.msra.mxu0 0
        %1852 = vmatprep.subr.bf16.mxu0 0
        %1853 = vmatpush2.bf16.msra.mxu0 0
        %1854 = vmatprep.subr.bf16.mxu0 0
        %1855 = vmatpush2.bf16.msra.mxu0 0
        %1856 = vmatprep.subr.bf16.mxu0 0
        %1857 = vmatpush2.bf16.msra.mxu0 0
        %1858 = vmatprep.subr.bf16.mxu0 0
        %1859 = vmatpush2.bf16.msra.mxu0 0
        %1860 = vmatprep.subr.bf16.mxu0 0
        %1861 = vmatpush2.bf16.msra.mxu0 0
        %1862 = vmatprep.subr.bf16.mxu0 0
        %1863 = vmatpush2.bf16.msra.mxu0 0
        %1864 = vmatprep.subr.bf16.mxu0 0
        %1865 = vmatpush2.bf16.msra.mxu0 0
        %1866 = vmatprep.mubr.bf16.mxu0 0
        %1867 = vmatmul.mubr.bf16.gmra.mxu0 %v1829
        %v1868 = vpop.f32.mrf.mxu0
        %v1869 = vadd.f32 0.0, %v1868
        %v1870 = vpop.f32.mrf.mxu0
        %v1871 = vpop.f32.mrf.mxu0
        %v1872 = vpop.f32.mrf.mxu0
        %1873 = vdwg.mxu0
        %v1875 = vsel %vm1209, %v1685, 0
        %v1878 = vsel %vm1692, %v1205, 0
        %1880 = vmatprep.subr.bf16.mxu0 0
        %1881 = vmatpush1.bf16.msra.mxu0 0
        %1882 = vmatprep.subr.bf16.mxu0 0
        %1883 = vmatpush1.bf16.msra.mxu0 0
        %1884 = vmatprep.subr.bf16.mxu0 0
        %1885 = vmatpush1.bf16.msra.mxu0 0
        %1886 = vmatprep.subr.bf16.mxu0 0
        %1887 = vmatpush1.bf16.msra.mxu0 0
        %1888 = vmatprep.subr.bf16.mxu0 0
        %1889 = vmatpush1.bf16.msra.mxu0 0
        %1890 = vmatprep.subr.bf16.mxu0 0
        %1891 = vmatpush1.bf16.msra.mxu0 0
        %1892 = vmatprep.subr.bf16.mxu0 0
        %1893 = vmatpush1.bf16.msra.mxu0 0
        %1894 = vmatprep.subr.bf16.mxu0 0
        %1895 = vmatpush1.bf16.msra.mxu0 %v1878
        %1896 = vmatprep.subr.bf16.mxu0 0
        %1897 = vmatpush2.bf16.msra.mxu0 0
        %1898 = vmatprep.subr.bf16.mxu0 0
        %1899 = vmatpush2.bf16.msra.mxu0 0
        %1900 = vmatprep.subr.bf16.mxu0 0
        %1901 = vmatpush2.bf16.msra.mxu0 0
        %1902 = vmatprep.subr.bf16.mxu0 0
        %1903 = vmatpush2.bf16.msra.mxu0 0
        %1904 = vmatprep.subr.bf16.mxu0 0
        %1905 = vmatpush2.bf16.msra.mxu0 0
        %1906 = vmatprep.subr.bf16.mxu0 0
        %1907 = vmatpush2.bf16.msra.mxu0 0
        %1908 = vmatprep.subr.bf16.mxu0 0
        %1909 = vmatpush2.bf16.msra.mxu0 0
        %1910 = vmatprep.subr.bf16.mxu0 0
        %1911 = vmatpush2.bf16.msra.mxu0 0
        %1912 = vmatprep.mubr.bf16.mxu0 0
        %1913 = vmatmul.mubr.bf16.gmra.mxu0 %v1875
        %v1914 = vpop.f32.mrf.mxu0
        %v1915 = vadd.f32 0.0, %v1914
        %v1916 = vpop.f32.mrf.mxu0
        %v1917 = vpop.f32.mrf.mxu0
        %v1918 = vpop.f32.mrf.mxu0
        %1919 = vdwg.mxu0
        %v1921 = vsel %vm1209, %v1686, 0
        %v1924 = vsel %vm1692, %v1206, 0
        %1926 = vmatprep.subr.bf16.mxu0 0
        %1927 = vmatpush1.bf16.msra.mxu0 0
        %1928 = vmatprep.subr.bf16.mxu0 0
        %1929 = vmatpush1.bf16.msra.mxu0 0
        %1930 = vmatprep.subr.bf16.mxu0 0
        %1931 = vmatpush1.bf16.msra.mxu0 0
        %1932 = vmatprep.subr.bf16.mxu0 0
        %1933 = vmatpush1.bf16.msra.mxu0 0
        %1934 = vmatprep.subr.bf16.mxu0 0
        %1935 = vmatpush1.bf16.msra.mxu0 0
        %1936 = vmatprep.subr.bf16.mxu0 0
        %1937 = vmatpush1.bf16.msra.mxu0 0
        %1938 = vmatprep.subr.bf16.mxu0 0
        %1939 = vmatpush1.bf16.msra.mxu0 0
        %1940 = vmatprep.subr.bf16.mxu0 0
        %1941 = vmatpush1.bf16.msra.mxu0 %v1924
        %1942 = vmatprep.subr.bf16.mxu0 0
        %1943 = vmatpush2.bf16.msra.mxu0 0
        %1944 = vmatprep.subr.bf16.mxu0 0
        %1945 = vmatpush2.bf16.msra.mxu0 0
        %1946 = vmatprep.subr.bf16.mxu0 0
        %1947 = vmatpush2.bf16.msra.mxu0 0
        %1948 = vmatprep.subr.bf16.mxu0 0
        %1949 = vmatpush2.bf16.msra.mxu0 0
        %1950 = vmatprep.subr.bf16.mxu0 0
        %1951 = vmatpush2.bf16.msra.mxu0 0
        %1952 = vmatprep.subr.bf16.mxu0 0
        %1953 = vmatpush2.bf16.msra.mxu0 0
        %1954 = vmatprep.subr.bf16.mxu0 0
        %1955 = vmatpush2.bf16.msra.mxu0 0
        %1956 = vmatprep.subr.bf16.mxu0 0
        %1957 = vmatpush2.bf16.msra.mxu0 0
        %1958 = vmatprep.mubr.bf16.mxu0 0
        %1959 = vmatmul.mubr.bf16.gmra.mxu0 %v1921
        %v1960 = vpop.f32.mrf.mxu0
        %v1961 = vadd.f32 0.0, %v1960
        %v1962 = vpop.f32.mrf.mxu0
        %v1963 = vpop.f32.mrf.mxu0
        %v1964 = vpop.f32.mrf.mxu0
        %1965 = vdwg.mxu0
        %v1967 = vsel %vm1209, %v1687, 0
        %v1970 = vsel %vm1692, %v1207, 0
        %1972 = vmatprep.subr.bf16.mxu0 0
        %1973 = vmatpush1.bf16.msra.mxu0 0
        %1974 = vmatprep.subr.bf16.mxu0 0
        %1975 = vmatpush1.bf16.msra.mxu0 0
        %1976 = vmatprep.subr.bf16.mxu0 0
        %1977 = vmatpush1.bf16.msra.mxu0 0
        %1978 = vmatprep.subr.bf16.mxu0 0
        %1979 = vmatpush1.bf16.msra.mxu0 0
        %1980 = vmatprep.subr.bf16.mxu0 0
        %1981 = vmatpush1.bf16.msra.mxu0 0
        %1982 = vmatprep.subr.bf16.mxu0 0
        %1983 = vmatpush1.bf16.msra.mxu0 0
        %1984 = vmatprep.subr.bf16.mxu0 0
        %1985 = vmatpush1.bf16.msra.mxu0 0
        %1986 = vmatprep.subr.bf16.mxu0 0
        %1987 = vmatpush1.bf16.msra.mxu0 %v1970
        %1988 = vmatprep.subr.bf16.mxu0 0
        %1989 = vmatpush2.bf16.msra.mxu0 0
        %1990 = vmatprep.subr.bf16.mxu0 0
        %1991 = vmatpush2.bf16.msra.mxu0 0
        %1992 = vmatprep.subr.bf16.mxu0 0
        %1993 = vmatpush2.bf16.msra.mxu0 0
        %1994 = vmatprep.subr.bf16.mxu0 0
        %1995 = vmatpush2.bf16.msra.mxu0 0
        %1996 = vmatprep.subr.bf16.mxu0 0
        %1997 = vmatpush2.bf16.msra.mxu0 0
        %1998 = vmatprep.subr.bf16.mxu0 0
        %1999 = vmatpush2.bf16.msra.mxu0 0
        %2000 = vmatprep.subr.bf16.mxu0 0
        %2001 = vmatpush2.bf16.msra.mxu0 0
        %2002 = vmatprep.subr.bf16.mxu0 0
        %2003 = vmatpush2.bf16.msra.mxu0 0
        %2004 = vmatprep.mubr.bf16.mxu0 0
        %2005 = vmatmul.mubr.bf16.gmra.mxu0 %v1967
        %v2006 = vpop.f32.mrf.mxu0
        %v2007 = vadd.f32 0.0, %v2006
        %v2008 = vpop.f32.mrf.mxu0
        %v2009 = vpop.f32.mrf.mxu0
        %v2010 = vpop.f32.mrf.mxu0
        %2011 = vdwg.mxu0
        %v2013 = vsel %vm1209, %v1688, 0
        %v2016 = vsel %vm1692, %v1208, 0
        %2018 = vmatprep.subr.bf16.mxu0 0
        %2019 = vmatpush1.bf16.msra.mxu0 0
        %2020 = vmatprep.subr.bf16.mxu0 0
        %2021 = vmatpush1.bf16.msra.mxu0 0
        %2022 = vmatprep.subr.bf16.mxu0 0
        %2023 = vmatpush1.bf16.msra.mxu0 0
        %2024 = vmatprep.subr.bf16.mxu0 0
        %2025 = vmatpush1.bf16.msra.mxu0 0
        %2026 = vmatprep.subr.bf16.mxu0 0
        %2027 = vmatpush1.bf16.msra.mxu0 0
        %2028 = vmatprep.subr.bf16.mxu0 0
        %2029 = vmatpush1.bf16.msra.mxu0 0
        %2030 = vmatprep.subr.bf16.mxu0 0
        %2031 = vmatpush1.bf16.msra.mxu0 0
        %2032 = vmatprep.subr.bf16.mxu0 0
        %2033 = vmatpush1.bf16.msra.mxu0 %v2016
        %2034 = vmatprep.subr.bf16.mxu0 0
        %2035 = vmatpush2.bf16.msra.mxu0 0
        %2036 = vmatprep.subr.bf16.mxu0 0
        %2037 = vmatpush2.bf16.msra.mxu0 0
        %2038 = vmatprep.subr.bf16.mxu0 0
        %2039 = vmatpush2.bf16.msra.mxu0 0
        %2040 = vmatprep.subr.bf16.mxu0 0
        %2041 = vmatpush2.bf16.msra.mxu0 0
        %2042 = vmatprep.subr.bf16.mxu0 0
        %2043 = vmatpush2.bf16.msra.mxu0 0
        %2044 = vmatprep.subr.bf16.mxu0 0
        %2045 = vmatpush2.bf16.msra.mxu0 0
        %2046 = vmatprep.subr.bf16.mxu0 0
        %2047 = vmatpush2.bf16.msra.mxu0 0
        %2048 = vmatprep.subr.bf16.mxu0 0
        %2049 = vmatpush2.bf16.msra.mxu0 0
        %2050 = vmatprep.mubr.bf16.mxu0 0
        %2051 = vmatmul.mubr.bf16.gmra.mxu0 %v2013
        %v2052 = vpop.f32.mrf.mxu0
        %v2053 = vadd.f32 0.0, %v2052
        %v2054 = vpop.f32.mrf.mxu0
        %v2055 = vpop.f32.mrf.mxu0
        %v2056 = vpop.f32.mrf.mxu0
        %2057 = vdwg.mxu0
        %2059 = vrot.lane.b32.xlu0 %v1777, 8
        %v2060 = vpop.permute.xlu0 %2059
        %2063 = vrot.lane.b32.xlu0 %v1823, 16
        %v2064 = vpop.permute.xlu0 %2063
        %2067 = vrot.lane.b32.xlu0 %v1869, 24
        %v2068 = vpop.permute.xlu0 %2067
        %v2070 = vsel %vm1209, %v1731, %v2060
        %vm2071 = vcmask 130048
        %v2072 = vsel %vm2071, %v2070, %v2064
        %vm2073 = vcmask 195584
        %v2074 = vsel %vm2073, %v2072, %v2068
        %2076 = vrot.lane.b32.xlu0 %v1961, 8
        %v2077 = vpop.permute.xlu0 %2076
        %2080 = vrot.lane.b32.xlu0 %v2007, 16
        %v2081 = vpop.permute.xlu0 %2080
        %2084 = vrot.lane.b32.xlu0 %v2053, 24
        %v2085 = vpop.permute.xlu0 %2084
        %v2087 = vsel %vm1209, %v1915, %v2077
        %v2088 = vsel %vm2071, %v2087, %v2081
        %v2089 = vsel %vm2073, %v2088, %v2085
        %v2090 = vld [vmem:[%s743] sm:$0xf]
        %v2091 = vld [vmem:[%s743 + $0x4] sm:$0xf]
        %v2092 = vld [vmem:[%s743 + $0x8] sm:$0xf]
        %v2093 = vld [vmem:[%s743 + $0xc] sm:$0xf]
        %v2094 = vld [vmem:[%s746] sm:$0x1]
        %v2095 = vpack.c.bf16 %v2089, %v2074
        %v2097 = vlaneseq
        %v2098 = vshrl.u32 %v2097, 7
        %v2099 = vsub.s32 0, %v2098
        %v2100 = vrot.slane %v2094, %v2099
        %v2106 = vunpack.c.l.b16 %v2090
        %v2107 = vunpack.c.l.b16 %v2091
        %v2108 = vunpack.c.l.b16 %v2092
        %v2109 = vunpack.c.l.b16 %v2093
        %v2110 = vpack.c.b16 %v2107, %v2106
        %v2111 = vpack.c.b16 %v2109, %v2108
        %vm2114 = vcmask 261120
        %v2116 = vsel %vm2114, %v2095, 0
        %2118 = vmatprep.subr.bf16.mxu0 0
        %2119 = vmatpush1.bf16.msra.mxu0 0
        %2120 = vmatprep.subr.bf16.mxu0 0
        %2121 = vmatpush1.bf16.msra.mxu0 0
        %2122 = vmatprep.subr.bf16.mxu0 0
        %2123 = vmatpush1.bf16.msra.mxu0 0
        %2124 = vmatprep.subr.bf16.mxu0 0
        %2125 = vmatpush1.bf16.msra.mxu0 0
        %2126 = vmatprep.subr.bf16.mxu0 0
        %2127 = vmatpush1.bf16.msra.mxu0 0
        %2128 = vmatprep.subr.bf16.mxu0 0
        %2129 = vmatpush1.bf16.msra.mxu0 0
        %2130 = vmatprep.subr.bf16.mxu0 0
        %2131 = vmatpush1.bf16.msra.mxu0 %v2111
        %2132 = vmatprep.subr.bf16.mxu0 0
        %2133 = vmatpush1.bf16.msra.mxu0 %v2110
        %2134 = vmatprep.subr.bf16.mxu0 0
        %2135 = vmatpush2.bf16.msra.mxu0 0
        %2136 = vmatprep.subr.bf16.mxu0 0
        %2137 = vmatpush2.bf16.msra.mxu0 0
        %2138 = vmatprep.subr.bf16.mxu0 0
        %2139 = vmatpush2.bf16.msra.mxu0 0
        %2140 = vmatprep.subr.bf16.mxu0 0
        %2141 = vmatpush2.bf16.msra.mxu0 0
        %2142 = vmatprep.subr.bf16.mxu0 0
        %2143 = vmatpush2.bf16.msra.mxu0 0
        %2144 = vmatprep.subr.bf16.mxu0 0
        %2145 = vmatpush2.bf16.msra.mxu0 0
        %2146 = vmatprep.subr.bf16.mxu0 0
        %2147 = vmatpush2.bf16.msra.mxu0 0
        %2148 = vmatprep.subr.bf16.mxu0 0
        %2149 = vmatpush2.bf16.msra.mxu0 0
        %2150 = vmatprep.mubr.bf16.mxu0 0
        %2151 = vmatmul.mubr.bf16.gmra.mxu0 %v2116
        %v2152 = vpop.f32.mrf.mxu0
        %v2153 = vadd.f32 %v2100, %v2152
        %v2154 = vpop.f32.mrf.mxu0
        %v2155 = vpop.f32.mrf.mxu0
        %v2156 = vadd.f32 %v2100, %v2155
        %v2157 = vpop.f32.mrf.mxu0
        %2158 = vdwg.mxu0
        %v2159 = vadd.f32 %v784, %v2153
        %v2160 = vadd.f32 %v785, %v2156
        %v2161 = vld [vmem:[%s749] sm:$0x1]
        %v2162 = vld [vmem:[%s752] sm:$0x1]
        %vm2163 = vcmp.lt.s32.totalorder %v1581, 32
        %v2164 = vsel %vm2163, 1, 0
        %v2165 = vcvt.s32.f32 %v2164
        %2166 = vadd.xlane.f32.xlu0 %v2159
        %v2167 = vpop.xlane.xlu0 %2166
        %2168 = vadd.xlane.f32.xlu0 %v2160
        %v2169 = vpop.xlane.xlu0 %2168
        %v2170 = vmul.f32 %v2167, 0.03125
        %v2171 = vmul.f32 %v2169, 0.03125
        %v2172 = vsub.f32 %v2159, %v2170
        %v2173 = vsub.f32 %v2160, %v2171
        %v2174 = vmul.f32 %v2172, %v2165
        %v2175 = vmul.f32 %v2173, %v2165
        %v2176 = vmul.f32 %v2174, %v2174
        %v2177 = vmul.f32 %v2175, %v2175
        %2178 = vadd.xlane.f32.xlu0 %v2176
        %v2179 = vpop.xlane.xlu0 %2178
        %2180 = vadd.xlane.f32.xlu0 %v2177
        %v2181 = vpop.xlane.xlu0 %2180
        %v2182 = vmul.f32 %v2179, 0.03125
        %v2183 = vmul.f32 %v2181, 0.03125
        %v2184 = vadd.f32 %v2182, 1e-05
        %v2185 = vadd.f32 %v2183, 1e-05
        %v2186 = vrsqrt.pop %v2184
        %v2187 = vrsqrt.pop %v2185
        %v2188 = vmul.f32 %v2174, %v2186
        %v2189 = vmul.f32 %v2175, %v2187
        %v2191 = vlaneseq
        %v2192 = vshrl.u32 %v2191, 7
        %v2193 = vsub.s32 0, %v2192
        %v2194 = vrot.slane %v2161, %v2193
        %v2196 = vmul.f32 %v2188, %v2194
        %v2197 = vmul.f32 %v2189, %v2194
        %v2199 = vlaneseq
        %v2200 = vshrl.u32 %v2199, 7
        %v2201 = vsub.s32 0, %v2200
        %v2202 = vrot.slane %v2162, %v2201
        %v2204 = vadd.f32 %v2196, %v2202
        %v2205 = vadd.f32 %v2197, %v2202
        %v2206 = vld [vmem:[%s757] sm:$0xf]
        %v2207 = vld [vmem:[%s757 + $0x4] sm:$0xf]
        %v2208 = vld [vmem:[%s757 + $0x8] sm:$0xf]
        %v2209 = vld [vmem:[%s757 + $0xc] sm:$0xf]
        %v2210 = vld [vmem:[%s757 + $0x10] sm:$0xf]
        %v2211 = vld [vmem:[%s757 + $0x14] sm:$0xf]
        %v2212 = vld [vmem:[%s757 + $0x18] sm:$0xf]
        %v2213 = vld [vmem:[%s757 + $0x1c] sm:$0xf]
        %v2214 = vld [vmem:[%s757 + $0x20] sm:$0xf]
        %v2215 = vld [vmem:[%s757 + $0x24] sm:$0xf]
        %v2216 = vld [vmem:[%s757 + $0x28] sm:$0xf]
        %v2217 = vld [vmem:[%s757 + $0x2c] sm:$0xf]
        %v2218 = vld [vmem:[%s757 + $0x30] sm:$0xf]
        %v2219 = vld [vmem:[%s757 + $0x34] sm:$0xf]
        %v2220 = vld [vmem:[%s757 + $0x38] sm:$0xf]
        %v2221 = vld [vmem:[%s757 + $0x3c] sm:$0xf]
        %v2222 = vld [vmem:[%s760] sm:$0x1]
        %v2223 = vpack.c.bf16 %v2205, %v2204
        %v2225 = vlaneseq
        %v2226 = vshrl.u32 %v2225, 7
        %v2227 = vsub.s32 0, %v2226
        %v2228 = vrot.slane %v2222, %v2227
        %v2246 = vunpack.c.l.b16 %v2206
        %v2247 = vunpack.c.l.b16 %v2207
        %v2248 = vunpack.c.l.b16 %v2208
        %v2249 = vunpack.c.l.b16 %v2209
        %v2250 = vunpack.c.l.b16 %v2210
        %v2251 = vunpack.c.l.b16 %v2211
        %v2252 = vunpack.c.l.b16 %v2212
        %v2253 = vunpack.c.l.b16 %v2213
        %v2254 = vunpack.c.l.b16 %v2214
        %v2255 = vunpack.c.l.b16 %v2215
        %v2256 = vunpack.c.l.b16 %v2216
        %v2257 = vunpack.c.l.b16 %v2217
        %v2258 = vunpack.c.l.b16 %v2218
        %v2259 = vunpack.c.l.b16 %v2219
        %v2260 = vunpack.c.l.b16 %v2220
        %v2261 = vunpack.c.l.b16 %v2221
        %v2262 = vpack.c.b16 %v2247, %v2246
        %v2263 = vpack.c.b16 %v2249, %v2248
        %v2264 = vpack.c.b16 %v2251, %v2250
        %v2265 = vpack.c.b16 %v2253, %v2252
        %v2266 = vpack.c.b16 %v2255, %v2254
        %v2267 = vpack.c.b16 %v2257, %v2256
        %v2268 = vpack.c.b16 %v2259, %v2258
        %v2269 = vpack.c.b16 %v2261, %v2260
        %2278 = vmatprep.subr.bf16.mxu0 0
        %2279 = vmatpush1.bf16.msra.mxu0 %v2269
        %2280 = vmatprep.subr.bf16.mxu0 0
        %2281 = vmatpush1.bf16.msra.mxu0 %v2268
        %2282 = vmatprep.subr.bf16.mxu0 0
        %2283 = vmatpush1.bf16.msra.mxu0 %v2267
        %2284 = vmatprep.subr.bf16.mxu0 0
        %2285 = vmatpush1.bf16.msra.mxu0 %v2266
        %2286 = vmatprep.subr.bf16.mxu0 0
        %2287 = vmatpush1.bf16.msra.mxu0 %v2265
        %2288 = vmatprep.subr.bf16.mxu0 0
        %2289 = vmatpush1.bf16.msra.mxu0 %v2264
        %2290 = vmatprep.subr.bf16.mxu0 0
        %2291 = vmatpush1.bf16.msra.mxu0 %v2263
        %2292 = vmatprep.subr.bf16.mxu0 0
        %2293 = vmatpush1.bf16.msra.mxu0 %v2262
        %2294 = vmatprep.subr.bf16.mxu0 0
        %2295 = vmatpush2.bf16.msra.mxu0 0
        %2296 = vmatprep.subr.bf16.mxu0 0
        %2297 = vmatpush2.bf16.msra.mxu0 0
        %2298 = vmatprep.subr.bf16.mxu0 0
        %2299 = vmatpush2.bf16.msra.mxu0 0
        %2300 = vmatprep.subr.bf16.mxu0 0
        %2301 = vmatpush2.bf16.msra.mxu0 0
        %2302 = vmatprep.subr.bf16.mxu0 0
        %2303 = vmatpush2.bf16.msra.mxu0 0
        %2304 = vmatprep.subr.bf16.mxu0 0
        %2305 = vmatpush2.bf16.msra.mxu0 0
        %2306 = vmatprep.subr.bf16.mxu0 0
        %2307 = vmatpush2.bf16.msra.mxu0 0
        %2308 = vmatprep.subr.bf16.mxu0 0
        %2309 = vmatpush2.bf16.msra.mxu0 0
        %2310 = vmatprep.mubr.bf16.mxu0 0
        %2311 = vmatmul.mubr.bf16.gmra.mxu0 %v2223
        %v2312 = vpop.f32.mrf.mxu0
        %v2313 = vadd.f32 %v2228, %v2312
        %v2314 = vpop.f32.mrf.mxu0
        %v2315 = vpop.f32.mrf.mxu0
        %v2316 = vadd.f32 %v2228, %v2315
        %v2317 = vpop.f32.mrf.mxu0
        %2318 = vdwg.mxu0
        %v2319 = vmul.f32 %v2313, 0.5
        %v2320 = vmul.f32 %v2316, 0.5
        %v2321 = vmul.f32 %v2313, 0.70710677
        %v2322 = vmul.f32 %v2316, 0.70710677
        %v2323 = verf.f32.pop %v2321
        %v2324 = verf.f32.pop %v2322
        %v2325 = vadd.f32 %v2323, 1.0
        %v2326 = vadd.f32 %v2324, 1.0
        %v2327 = vmul.f32 %v2319, %v2325
        %v2328 = vmul.f32 %v2320, %v2326
        %v2329 = vld [vmem:[%s765] sm:$0xf]
        %v2330 = vld [vmem:[%s765 + $0x4] sm:$0xf]
        %v2331 = vld [vmem:[%s765 + $0x8] sm:$0xf]
        %v2332 = vld [vmem:[%s765 + $0xc] sm:$0xf]
        %v2333 = vld [vmem:[%s765 + $0x10] sm:$0xf]
        %v2334 = vld [vmem:[%s765 + $0x14] sm:$0xf]
        %v2335 = vld [vmem:[%s765 + $0x18] sm:$0xf]
        %v2336 = vld [vmem:[%s765 + $0x1c] sm:$0xf]
        %v2337 = vld [vmem:[%s765 + $0x20] sm:$0xf]
        %v2338 = vld [vmem:[%s765 + $0x24] sm:$0xf]
        %v2339 = vld [vmem:[%s765 + $0x28] sm:$0xf]
        %v2340 = vld [vmem:[%s765 + $0x2c] sm:$0xf]
        %v2341 = vld [vmem:[%s765 + $0x30] sm:$0xf]
        %v2342 = vld [vmem:[%s765 + $0x34] sm:$0xf]
        %v2343 = vld [vmem:[%s765 + $0x38] sm:$0xf]
        %v2344 = vld [vmem:[%s765 + $0x3c] sm:$0xf]
        %v2345 = vld [vmem:[%s768] sm:$0x1]
        %v2346 = vpack.c.bf16 %v2328, %v2327
        %v2348 = vlaneseq
        %v2349 = vshrl.u32 %v2348, 7
        %v2350 = vsub.s32 0, %v2349
        %v2351 = vrot.slane %v2345, %v2350
        %v2369 = vunpack.c.l.b16 %v2329
        %v2370 = vunpack.c.l.b16 %v2330
        %v2371 = vunpack.c.l.b16 %v2331
        %v2372 = vunpack.c.l.b16 %v2332
        %v2373 = vunpack.c.l.b16 %v2333
        %v2374 = vunpack.c.l.b16 %v2334
        %v2375 = vunpack.c.l.b16 %v2335
        %v2376 = vunpack.c.l.b16 %v2336
        %v2377 = vunpack.c.l.b16 %v2337
        %v2378 = vunpack.c.l.b16 %v2338
        %v2379 = vunpack.c.l.b16 %v2339
        %v2380 = vunpack.c.l.b16 %v2340
        %v2381 = vunpack.c.l.b16 %v2341
        %v2382 = vunpack.c.l.b16 %v2342
        %v2383 = vunpack.c.l.b16 %v2343
        %v2384 = vunpack.c.l.b16 %v2344
        %v2385 = vpack.c.b16 %v2370, %v2369
        %v2386 = vpack.c.b16 %v2372, %v2371
        %v2387 = vpack.c.b16 %v2374, %v2373
        %v2388 = vpack.c.b16 %v2376, %v2375
        %v2389 = vpack.c.b16 %v2378, %v2377
        %v2390 = vpack.c.b16 %v2380, %v2379
        %v2391 = vpack.c.b16 %v2382, %v2381
        %v2392 = vpack.c.b16 %v2384, %v2383
        %2401 = vmatprep.subr.bf16.mxu0 0
        %2402 = vmatpush1.bf16.msra.mxu0 %v2392
        %2403 = vmatprep.subr.bf16.mxu0 0
        %2404 = vmatpush1.bf16.msra.mxu0 %v2391
        %2405 = vmatprep.subr.bf16.mxu0 0
        %2406 = vmatpush1.bf16.msra.mxu0 %v2390
        %2407 = vmatprep.subr.bf16.mxu0 0
        %2408 = vmatpush1.bf16.msra.mxu0 %v2389
        %2409 = vmatprep.subr.bf16.mxu0 0
        %2410 = vmatpush1.bf16.msra.mxu0 %v2388
        %2411 = vmatprep.subr.bf16.mxu0 0
        %2412 = vmatpush1.bf16.msra.mxu0 %v2387
        %2413 = vmatprep.subr.bf16.mxu0 0
        %2414 = vmatpush1.bf16.msra.mxu0 %v2386
        %2415 = vmatprep.subr.bf16.mxu0 0
        %2416 = vmatpush1.bf16.msra.mxu0 %v2385
        %2417 = vmatprep.subr.bf16.mxu0 0
        %2418 = vmatpush2.bf16.msra.mxu0 0
        %2419 = vmatprep.subr.bf16.mxu0 0
        %2420 = vmatpush2.bf16.msra.mxu0 0
        %2421 = vmatprep.subr.bf16.mxu0 0
        %2422 = vmatpush2.bf16.msra.mxu0 0
        %2423 = vmatprep.subr.bf16.mxu0 0
        %2424 = vmatpush2.bf16.msra.mxu0 0
        %2425 = vmatprep.subr.bf16.mxu0 0
        %2426 = vmatpush2.bf16.msra.mxu0 0
        %2427 = vmatprep.subr.bf16.mxu0 0
        %2428 = vmatpush2.bf16.msra.mxu0 0
        %2429 = vmatprep.subr.bf16.mxu0 0
        %2430 = vmatpush2.bf16.msra.mxu0 0
        %2431 = vmatprep.subr.bf16.mxu0 0
        %2432 = vmatpush2.bf16.msra.mxu0 0
        %2433 = vmatprep.mubr.bf16.mxu0 0
        %2434 = vmatmul.mubr.bf16.gmra.mxu0 %v2346
        %v2435 = vpop.f32.mrf.mxu0
        %v2436 = vadd.f32 %v2351, %v2435
        %v2437 = vpop.f32.mrf.mxu0
        %v2438 = vpop.f32.mrf.mxu0
        %v2439 = vadd.f32 %v2351, %v2438
        %v2440 = vpop.f32.mrf.mxu0
        %2441 = vdwg.mxu0
        %v2442 = vadd.f32 %v2204, %v2436
        %v2443 = vadd.f32 %v2205, %v2439
        %v2444 = vld [vmem:[%s771] sm:$0x1]
        %v2445 = vld [vmem:[%s774] sm:$0x1]
        %2446 = vadd.xlane.f32.xlu0 %v2442
        %v2447 = vpop.xlane.xlu0 %2446
        %2448 = vadd.xlane.f32.xlu0 %v2443
        %v2449 = vpop.xlane.xlu0 %2448
        %v2450 = vmul.f32 %v2447, 0.03125
        %v2451 = vmul.f32 %v2449, 0.03125
        %v2452 = vsub.f32 %v2442, %v2450
        %v2453 = vsub.f32 %v2443, %v2451
        %v2454 = vmul.f32 %v2452, %v2165
        %v2455 = vmul.f32 %v2453, %v2165
        %v2456 = vmul.f32 %v2454, %v2454
        %v2457 = vmul.f32 %v2455, %v2455
        %2458 = vadd.xlane.f32.xlu0 %v2456
        %v2459 = vpop.xlane.xlu0 %2458
        %2460 = vadd.xlane.f32.xlu0 %v2457
        %v2461 = vpop.xlane.xlu0 %2460
        %v2462 = vmul.f32 %v2459, 0.03125
        %v2463 = vmul.f32 %v2461, 0.03125
        %v2464 = vadd.f32 %v2462, 1e-05
        %v2465 = vadd.f32 %v2463, 1e-05
        %v2466 = vrsqrt.pop %v2464
        %v2467 = vrsqrt.pop %v2465
        %v2468 = vmul.f32 %v2454, %v2466
        %v2469 = vmul.f32 %v2455, %v2467
        %v2471 = vlaneseq
        %v2472 = vshrl.u32 %v2471, 7
        %v2473 = vsub.s32 0, %v2472
        %v2474 = vrot.slane %v2444, %v2473
        %v2476 = vmul.f32 %v2468, %v2474
        %v2477 = vmul.f32 %v2469, %v2474
        %v2479 = vlaneseq
        %v2480 = vshrl.u32 %v2479, 7
        %v2481 = vsub.s32 0, %v2480
        %v2482 = vrot.slane %v2445, %v2481
        %v2484 = vadd.f32 %v2476, %v2482
        %v2485 = vadd.f32 %v2477, %v2482
        %2486 = vst [vmem:[#allocation2] sm:$0xff] %v2484
        %2487 = vst [vmem:[#allocation2 + $0x8] sm:$0xff] %v2485
        // Predicated region
        $region93: #{tpu_custom_call.1} parent=87 // pred_check
          %p2488 = pneg %p479
        $region94: #{tpu_custom_call.1} parent=87 // pred_check_branch
          %2490 = sbr.rel (%p2488) target = $region96
        $region95: #{tpu_custom_call.1} parent=87 // pred_region
          %s2492 = ssub.s32 256, 256
          %2493 = vsyncadd [#allocation3], %s2492
          %s2494 = sshll.u32 [#allocation2], 4
          %s2495 = int_to_ptr.vmem [resolvable:$true] %s2494
          %2500 = dma.vmem_to_hbm [thread:$0]  %s2495, 256, %s17, [#allocation3], 128, 128, 8
        $region96: #{tpu_custom_call.1} parent=87 // pred_fallthru
          _
        // Predicated region
        $region97: #{tpu_custom_call.1} parent=87 // pred_check
          %p2501 = pneg %p479
        $region98: #{tpu_custom_call.1} parent=87 // pred_check_branch
          %2503 = sbr.rel (%p2501) target = $region100
        $region99: #{tpu_custom_call.1} parent=87 // pred_region
          %2504 = dma.done [#allocation3], 256
        $region100: #{tpu_custom_call.1} parent=87 // pred_fallthru
          _
      $region88: #{tpu_custom_call.1} parent=5 // pred_fallthru
        _
      %p2505 = scmp.le.s32.totalorder 2, %s24
      // Predicated region
      $region101: #{tpu_custom_call.1} parent=5 // pred_check
        %p2506 = pneg %p2505
      $region102: #{tpu_custom_call.1} parent=5 // pred_check_branch
        %2508 = sbr.rel (%p2506) target = $region104
      $region103: #{tpu_custom_call.1} parent=5 // pred_region
        %s2509 = ssub.s32 %s24, 2
      $region104: #{tpu_custom_call.1} parent=5 // pred_fallthru
        _
    $region6: #{tpu_custom_call.1} parent=1 // loop_footer
      %s28 = sadd.s32 1, %s24
    $region7: #{tpu_custom_call.1} parent=1 // loop_footer_branch
      %23 = sbr.rel target = $region3
    $region8: #{tpu_custom_call.1} parent=1 // loop_exit
      _
    %2510 = vsyncpa [#allocation3], 1
    %s2511 = scalar_lea.sflag [#allocation3], 1
    %2512 = vsyncpa %s2511, 1

</llo_original>
